<compile_context>
chip_gen: v6e
topology: v6e:2x2x1
jax: 0.10.0
libtpu: 0.0.40
codegen_flags: <defaults>
</compile_context>

<pallas_src>
import functools

import jax
import jax.numpy as jnp
import numpy as np
from jax import lax
from jax.experimental import pallas as pl
from jax.experimental.pallas import tpu as pltpu

EPS = 1e-5  # nn.InstanceNorm2d default eps (affine=False, biased variance)


def _round_up(x, m):
    return ((x + m - 1) // m) * m


# ---------------------------------------------------------------------------
# Fused kernel: whole residual block for one sample, flat (H, W*C) layout.
# ---------------------------------------------------------------------------
def _fused_resblock_kernel(H, W, Cin, Cout, d, has_ds, R0x, L0x, R0h, L0h,
                           x_ref, w1_ref, b1_ref, w2_ref, b2_ref,
                           g_ref, gt_ref, *rest):
    if has_ds:
        wd_ref, o_ref, xpad_s, hpad_s = rest
    else:
        o_ref, xpad_s, hpad_s = rest
        wd_ref = None

    WCin = W * Cin
    WCout = W * Cout
    inv_hw = 1.0 / float(H * W)

    def conv3x3(src_ref, r0, l0, cgrp, w_ref, b_ref):
        # src_ref: zero-bordered scratch; valid data origin (r0, l0), each
        # spatial column occupies `cgrp` lanes.  One matmul per kh: the patch
        # covers the whole kw window and w_ref[kh] is the banded
        # ((W+2d)*cgrp, W*Cout) matrix built in the wrapper.
        Pw = (W + 2 * d) * cgrp
        acc = None
        for kh in range(3):
            patch = src_ref[pl.ds(r0 + (kh - 1) * d, H),
                            pl.ds(l0 - d * cgrp, Pw)]
            part = jnp.dot(patch, w_ref[kh],
                           preferred_element_type=jnp.float32)
            acc = part if acc is None else acc + part
        return acc + b_ref[...]

    def instance_norm(h):
        # h: (H, W*Cout) flat-lane layout. One-pass per-channel stats;
        # flat<->channel gather/scatter done with tiny matmuls (G, G^T).
        col = jnp.sum(h, axis=0, keepdims=True)                  # (1, W*Cout)
        colsq = jnp.sum(h * h, axis=0, keepdims=True)            # (1, W*Cout)
        ch = jnp.dot(col, g_ref[...], preferred_element_type=jnp.float32)
        chsq = jnp.dot(colsq, g_ref[...], preferred_element_type=jnp.float32)
        mean = ch * inv_hw                                       # (1, Cout)
        var = chsq * inv_hw - mean * mean
        scale = lax.rsqrt(var + EPS)
        mean_f = jnp.dot(mean, gt_ref[...], preferred_element_type=jnp.float32)
        scale_f = jnp.dot(scale, gt_ref[...], preferred_element_type=jnp.float32)
        return (h - mean_f) * scale_f

    xv = x_ref[0]                                                # (H, W*Cin)

    # ---- in-kernel zero padding of the input (aligned interior store) ----
    xpad_s[...] = jnp.zeros(xpad_s.shape, jnp.float32)
    xpad_s[pl.ds(R0x, H), pl.ds(L0x, WCin)] = xv

    # ---- conv1 + InstanceNorm + ReLU ----
    h1 = conv3x3(xpad_s, R0x, L0x, Cin, w1_ref, b1_ref)
    h1 = jnp.maximum(instance_norm(h1), 0.0)

    # ---- pad h1 in VMEM (no HBM round-trip), conv2 + InstanceNorm ----
    hpad_s[...] = jnp.zeros(hpad_s.shape, jnp.float32)
    hpad_s[pl.ds(R0h, H), pl.ds(L0h, WCout)] = h1
    h2 = instance_norm(conv3x3(hpad_s, R0h, L0h, Cout, w2_ref, b2_ref))

    # ---- identity / downsample (1x1 conv + InstanceNorm) ----
    if has_ds:
        ident = jnp.dot(xv, wd_ref[...], preferred_element_type=jnp.float32)
        ident = instance_norm(ident)
    else:
        ident = xv                                               # Cin == Cout

    # ---- residual add + ReLU, lane-dense store ----
    o_ref[0] = jnp.maximum(h2 + ident, 0.0)


# ---------------------------------------------------------------------------
# Wrapper (NCHW <-> flat lane-dense layout, banded conv weight setup)
# ---------------------------------------------------------------------------
def _banded_conv_weights(w, d, W):
    # w: (3, 3, Ci, Co) HWIO.  Returns (3, (W+2d)*Ci, W*Co): one banded matrix
    # per kh implementing the whole kw sweep (with dilation) in the flat
    # (H, W*C) lane layout.  Entry [kh, (w+kw*d)*Ci + i, w*Co + o] = w[kh,kw,i,o].
    _, _, Ci, Co = w.shape
    P = W + 2 * d
    w32 = w.astype(jnp.float32)
    ar = jnp.arange(W)
    out = jnp.zeros((3, P * Ci, W * Co), jnp.float32)
    for kw in range(3):
        sel = jnp.zeros((P, W), jnp.float32).at[ar + kw * d, ar].set(1.0)
        out = out + jnp.einsum("pw,kio->kpiwo", sel,
                               w32[:, kw]).reshape(3, P * Ci, W * Co)
    return out


def residual_block_2d(x_nchw, params, dilation=1):
    w1, b1 = params["w1"], params["b1"]       # (3,3,Cin,Cout) HWIO, (Cout,)
    w2, b2 = params["w2"], params["b2"]
    wd = params.get("wd", None)
    has_ds = wd is not None

    N, Cin, H, W = x_nchw.shape
    Cout = w1.shape[-1]
    if not has_ds:
        assert Cin == Cout, "identity path requires in_channels == out_channels"
    d = int(dilation)
    WCin, WCout = W * Cin, W * Cout
    Pin, Pout = (W + 2 * d) * Cin, (W + 2 * d) * Cout

    # NCHW -> NHWC -> flat lane-dense (N, H, W*Cin)
    xf = jnp.transpose(x_nchw, (0, 2, 3, 1)).astype(jnp.float32).reshape(N, H, WCin)

    # Banded per-kh conv weights (kw sweep folded into the K dimension).
    wbd1 = _banded_conv_weights(w1, d, W)                        # (3, Pin, WCout)
    wbd2 = _banded_conv_weights(w2, d, W)                        # (3, Pout, WCout)
    b1f = jnp.tile(b1.astype(jnp.float32), W).reshape(1, WCout)
    b2f = jnp.tile(b2.astype(jnp.float32), W).reshape(1, WCout)
    # instance-norm gather / scatter constants: flat lanes <-> per-channel
    g = jnp.tile(jnp.eye(Cout, dtype=jnp.float32), (W, 1))       # (W*Cout, Cout)
    gt = jnp.transpose(g)                                        # (Cout, W*Cout)

    # zero-bordered scratch geometry: interior origin is (8,128)-aligned so the
    # interior store is an aligned vector store; only the patch *reads* are at
    # unaligned (static) offsets.
    R0x, L0x = _round_up(d, 8), _round_up(d * Cin, 128)
    R0h, L0h = _round_up(d, 8), _round_up(d * Cout, 128)
    xpad_shape = (H + 2 * R0x, WCin + 2 * L0x)
    hpad_shape = (H + 2 * R0h, WCout + 2 * L0h)

    def full_spec(shape):
        return pl.BlockSpec(shape, lambda n: (0,) * len(shape))

    in_specs = [
        pl.BlockSpec((1, H, WCin), lambda n: (n, 0, 0)),
        full_spec((3, Pin, WCout)),
        full_spec((1, WCout)),
        full_spec((3, Pout, WCout)),
        full_spec((1, WCout)),
        full_spec((WCout, Cout)),
        full_spec((Cout, WCout)),
    ]
    args = [xf, wbd1, b1f, wbd2, b2f, g, gt]
    if has_ds:
        eye_w = jnp.eye(W, dtype=jnp.float32)
        wbdd = jnp.einsum("ab,io->aibo", eye_w,
                          wd.astype(jnp.float32)).reshape(WCin, WCout)
        in_specs.append(full_spec((WCin, WCout)))
        args.append(wbdd)

    scratch_shapes = [pltpu.VMEM(xpad_shape, jnp.float32),
                      pltpu.VMEM(hpad_shape, jnp.float32)]

    # explicit VMEM budget: double-buffered blocks + scratch + headroom
    blk_bytes = 4 * (H * WCin + H * WCout + 3 * Pin * WCout + 3 * Pout * WCout
                     + 2 * WCout + 2 * WCout * Cout
                     + (WCin * WCout if has_ds else 0))
    scr_bytes = 4 * (xpad_shape[0] * xpad_shape[1] + hpad_shape[0] * hpad_shape[1])
    vmem_limit = int(min(max(2 * blk_bytes + scr_bytes + (4 << 20), 8 << 20),
                         64 << 20))

    kern = functools.partial(_fused_resblock_kernel, H, W, Cin, Cout, d, has_ds,
                             R0x, L0x, R0h, L0h)

    out_flat = pl.pallas_call(
        kern,
        out_shape=jax.ShapeDtypeStruct((N, H, WCout), jnp.float32),
        grid=(N,),
        in_specs=in_specs,
        out_specs=pl.BlockSpec((1, H, WCout), lambda n: (n, 0, 0)),
        scratch_shapes=scratch_shapes,
        compiler_params=pltpu.CompilerParams(
            dimension_semantics=("parallel",),
            vmem_limit_bytes=vmem_limit),
    )(*args)

    out = out_flat.reshape(N, H, W, Cout)
    return jnp.transpose(out, (0, 3, 1, 2))                      # back to NCHW


# ---------------------------------------------------------------------------
# Pure-JAX reference (correctness check only)
# ---------------------------------------------------------------------------
def _conv_ref(x, w, b, d):
    out = lax.conv_general_dilated(
        x, w, window_strides=(1, 1), padding=[(d, d), (d, d)],
        rhs_dilation=(d, d), dimension_numbers=("NHWC", "HWIO", "NHWC"),
        precision=lax.Precision.HIGHEST)
    if b is not None:
        out = out + b.reshape(1, 1, 1, -1)
    return out


def _instance_norm_ref(h):
    mean = jnp.mean(h, axis=(1, 2), keepdims=True)
    var = jnp.mean((h - mean) ** 2, axis=(1, 2), keepdims=True)
    return (h - mean) / jnp.sqrt(var + EPS)


def residual_block_2d_ref(x_nchw, params, dilation=1):
    x = jnp.transpose(x_nchw, (0, 2, 3, 1)).astype(jnp.float32)
    h = _conv_ref(x, params["w1"], params["b1"], dilation)
    h = jnp.maximum(_instance_norm_ref(h), 0.0)
    h = _conv_ref(h, params["w2"], params["b2"], dilation)
    h = _instance_norm_ref(h)
    if params.get("wd", None) is not None:
        ident = jnp.einsum("nhwi,io->nhwo", x, params["wd"])
        ident = _instance_norm_ref(ident)
    else:
        ident = x
    out = jnp.maximum(h + ident, 0.0)
    return jnp.transpose(out, (0, 3, 1, 2))


# ---------------------------------------------------------------------------
if __name__ == "__main__":
    key = jax.random.PRNGKey(0)
    ks = jax.random.split(key, 8)

    # Config 1: in_channels != out_channels -> 1x1-conv/IN downsample path.
    N, Cin, Cout, H, W, d = 2, 4, 8, 16, 16, 1
    params = {
        "w1": 0.2 * jax.random.normal(ks[0], (3, 3, Cin, Cout), jnp.float32),
        "b1": 0.1 * jax.random.normal(ks[1], (Cout,), jnp.float32),
        "w2": 0.2 * jax.random.normal(ks[2], (3, 3, Cout, Cout), jnp.float32),
        "b2": 0.1 * jax.random.normal(ks[3], (Cout,), jnp.float32),
        "wd": 0.2 * jax.random.normal(ks[4], (Cin, Cout), jnp.float32),
    }
    x = jax.random.normal(ks[5], (N, Cin, H, W), jnp.float32)
    out = jax.block_until_ready(residual_block_2d(x, params, dilation=d))
    ref = jax.block_until_ready(residual_block_2d_ref(x, params, dilation=d))
    assert out.shape == (N, Cout, H, W)
    np.testing.assert_allclose(np.asarray(out), np.asarray(ref),
                               rtol=5e-2, atol=5e-2)

    # Config 2: in_channels == out_channels -> plain identity path, dilation=2.
    C2, d2 = 8, 2
    params2 = {
        "w1": 0.2 * jax.random.normal(ks[0], (3, 3, C2, C2), jnp.float32),
        "b1": 0.1 * jax.random.normal(ks[1], (C2,), jnp.float32),
        "w2": 0.2 * jax.random.normal(ks[2], (3, 3, C2, C2), jnp.float32),
        "b2": 0.1 * jax.random.normal(ks[3], (C2,), jnp.float32),
    }
    x2 = jax.random.normal(ks[6], (N, C2, H, W), jnp.float32)
    out2 = jax.block_until_ready(residual_block_2d(x2, params2, dilation=d2))
    ref2 = jax.block_until_ready(residual_block_2d_ref(x2, params2, dilation=d2))
    np.testing.assert_allclose(np.asarray(out2), np.asarray(ref2),
                               rtol=5e-2, atol=5e-2)

    print("KERNEL_OK")
</pallas_src>

<mosaic_0001>
module attributes {stable_mosaic.version = 11 : i64} {
  func.func @_fused_resblock_kernel(%arg0: i32, %arg1: memref<1x16x64xf32, #tpu.memory_space<vmem>>, %arg2: memref<3x72x128xf32, #tpu.memory_space<vmem>>, %arg3: memref<1x128xf32, #tpu.memory_space<vmem>>, %arg4: memref<3x144x128xf32, #tpu.memory_space<vmem>>, %arg5: memref<1x128xf32, #tpu.memory_space<vmem>>, %arg6: memref<128x8xf32, #tpu.memory_space<vmem>>, %arg7: memref<8x128xf32, #tpu.memory_space<vmem>>, %arg8: memref<64x128xf32, #tpu.memory_space<vmem>>, %arg9: memref<1x16x128xf32, #tpu.memory_space<vmem>>, %arg10: memref<32x320xf32, #tpu.memory_space<vmem>>, %arg11: memref<32x384xf32, #tpu.memory_space<vmem>>) attributes {dimension_semantics = [#tpu.dimension_semantics<parallel>], iteration_bounds = array<i64: 2>, scalar_prefetch = 0 : i64, scratch_operands = 2 : i64, tpu.core_type = #tpu.core_type<tc>, window_params = [{transform_indices = @transform_0, window_bounds = array<i64: 1, 16, 64>}, {pipeline_mode = #tpu.pipeline_mode<synchronous>, transform_indices = @transform_1, window_bounds = array<i64: 3, 72, 128>}, {pipeline_mode = #tpu.pipeline_mode<synchronous>, transform_indices = @transform_2, window_bounds = array<i64: 1, 128>}, {pipeline_mode = #tpu.pipeline_mode<synchronous>, transform_indices = @transform_3, window_bounds = array<i64: 3, 144, 128>}, {pipeline_mode = #tpu.pipeline_mode<synchronous>, transform_indices = @transform_4, window_bounds = array<i64: 1, 128>}, {pipeline_mode = #tpu.pipeline_mode<synchronous>, transform_indices = @transform_5, window_bounds = array<i64: 128, 8>}, {pipeline_mode = #tpu.pipeline_mode<synchronous>, transform_indices = @transform_6, window_bounds = array<i64: 8, 128>}, {pipeline_mode = #tpu.pipeline_mode<synchronous>, transform_indices = @transform_7, window_bounds = array<i64: 64, 128>}, {transform_indices = @transform_8, window_bounds = array<i64: 1, 16, 128>}]} {
    %c0 = arith.constant 0 : index
    %c0_0 = arith.constant 0 : index
    %c0_1 = arith.constant 0 : index
    %0 = vector.load %arg1[%c0, %c0_0, %c0_1] : memref<1x16x64xf32, #tpu.memory_space<vmem>>, vector<1x16x64xf32>
    %1 = vector.shape_cast %0 : vector<1x16x64xf32> to vector<16x64xf32>
    %cst = arith.constant 0.000000e+00 : f32
    %2 = vector.broadcast %cst : f32 to vector<32x320xf32>
    %c0_2 = arith.constant 0 : index
    %c0_3 = arith.constant 0 : index
    %3 = vector.load %arg10[%c0_2, %c0_3] : memref<32x320xf32, #tpu.memory_space<vmem>>, vector<32x320xf32>
    tpu.vector_store %arg10[%c0_2, %c0_3], %2 {strides = array<i32>} : memref<32x320xf32, #tpu.memory_space<vmem>>, vector<32x320xf32>,
    %c8 = arith.constant 8 : index
    %c128 = arith.constant 128 : index
    %4 = vector.load %arg10[%c8, %c128] : memref<32x320xf32, #tpu.memory_space<vmem>>, vector<16x64xf32>
    tpu.vector_store %arg10[%c8, %c128], %1 {strides = array<i32>} : memref<32x320xf32, #tpu.memory_space<vmem>>, vector<16x64xf32>,
    %c7 = arith.constant 7 : index
    %c124 = arith.constant 124 : index
    %5 = vector.load %arg10[%c7, %c124] : memref<32x320xf32, #tpu.memory_space<vmem>>, vector<16x72xf32>
    %c0_4 = arith.constant 0 : index
    %c0_5 = arith.constant 0 : index
    %c0_6 = arith.constant 0 : index
    %6 = vector.load %arg2[%c0_4, %c0_5, %c0_6] : memref<3x72x128xf32, #tpu.memory_space<vmem>>, vector<1x72x128xf32>
    %7 = vector.shape_cast %6 : vector<1x72x128xf32> to vector<72x128xf32>
    %cst_7 = arith.constant dense<0.000000e+00> : vector<16x128xf32>
    %8 = tpu.matmul %5, %7, %cst_7 {dimension_numbers = #tpu.dot_dimension_numbers<[1], [0], [0], [1], [0, 0, 1, 1], [], []>} : vector<16x72xf32>, vector<72x128xf32>, vector<16x128xf32> -> vector<16x128xf32>
    %c8_8 = arith.constant 8 : index
    %c124_9 = arith.constant 124 : index
    %9 = vector.load %arg10[%c8_8, %c124_9] : memref<32x320xf32, #tpu.memory_space<vmem>>, vector<16x72xf32>
    %c1 = arith.constant 1 : index
    %c0_10 = arith.constant 0 : index
    %c0_11 = arith.constant 0 : index
    %10 = vector.load %arg2[%c1, %c0_10, %c0_11] : memref<3x72x128xf32, #tpu.memory_space<vmem>>, vector<1x72x128xf32>
    %11 = vector.shape_cast %10 : vector<1x72x128xf32> to vector<72x128xf32>
    %cst_12 = arith.constant dense<0.000000e+00> : vector<16x128xf32>
    %12 = tpu.matmul %9, %11, %cst_12 {dimension_numbers = #tpu.dot_dimension_numbers<[1], [0], [0], [1], [0, 0, 1, 1], [], []>} : vector<16x72xf32>, vector<72x128xf32>, vector<16x128xf32> -> vector<16x128xf32>
    %13 = arith.addf %8, %12 : vector<16x128xf32>
    %c9 = arith.constant 9 : index
    %c124_13 = arith.constant 124 : index
    %14 = vector.load %arg10[%c9, %c124_13] : memref<32x320xf32, #tpu.memory_space<vmem>>, vector<16x72xf32>
    %c2 = arith.constant 2 : index
    %c0_14 = arith.constant 0 : index
    %c0_15 = arith.constant 0 : index
    %15 = vector.load %arg2[%c2, %c0_14, %c0_15] : memref<3x72x128xf32, #tpu.memory_space<vmem>>, vector<1x72x128xf32>
    %16 = vector.shape_cast %15 : vector<1x72x128xf32> to vector<72x128xf32>
    %cst_16 = arith.constant dense<0.000000e+00> : vector<16x128xf32>
    %17 = tpu.matmul %14, %16, %cst_16 {dimension_numbers = #tpu.dot_dimension_numbers<[1], [0], [0], [1], [0, 0, 1, 1], [], []>} : vector<16x72xf32>, vector<72x128xf32>, vector<16x128xf32> -> vector<16x128xf32>
    %18 = arith.addf %13, %17 : vector<16x128xf32>
    %c0_17 = arith.constant 0 : index
    %c0_18 = arith.constant 0 : index
    %19 = vector.load %arg3[%c0_17, %c0_18] : memref<1x128xf32, #tpu.memory_space<vmem>>, vector<1x128xf32>
    %20 = vector.broadcast %19 : vector<1x128xf32> to vector<16x128xf32>
    %21 = arith.addf %18, %20 : vector<16x128xf32>
    %cst_19 = arith.constant dense<0.000000e+00> : vector<128xf32>
    %22 = vector.multi_reduction <add>, %21, %cst_19 [0] : vector<16x128xf32> to vector<128xf32>
    %23 = vector.shape_cast %22 : vector<128xf32> to vector<1x128xf32>
    %24 = arith.mulf %21, %21 : vector<16x128xf32>
    %cst_20 = arith.constant dense<0.000000e+00> : vector<128xf32>
    %25 = vector.multi_reduction <add>, %24, %cst_20 [0] : vector<16x128xf32> to vector<128xf32>
    %26 = vector.shape_cast %25 : vector<128xf32> to vector<1x128xf32>
    %c0_21 = arith.constant 0 : index
    %c0_22 = arith.constant 0 : index
    %27 = vector.load %arg6[%c0_21, %c0_22] : memref<128x8xf32, #tpu.memory_space<vmem>>, vector<128x8xf32>
    %cst_23 = arith.constant dense<0.000000e+00> : vector<1x8xf32>
    %28 = tpu.matmul %23, %27, %cst_23 {dimension_numbers = #tpu.dot_dimension_numbers<[1], [0], [0], [1], [0, 0, 1, 1], [], []>} : vector<1x128xf32>, vector<128x8xf32>, vector<1x8xf32> -> vector<1x8xf32>
    %c0_24 = arith.constant 0 : index
    %c0_25 = arith.constant 0 : index
    %29 = vector.load %arg6[%c0_24, %c0_25] : memref<128x8xf32, #tpu.memory_space<vmem>>, vector<128x8xf32>
    %cst_26 = arith.constant dense<0.000000e+00> : vector<1x8xf32>
    %30 = tpu.matmul %26, %29, %cst_26 {dimension_numbers = #tpu.dot_dimension_numbers<[1], [0], [0], [1], [0, 0, 1, 1], [], []>} : vector<1x128xf32>, vector<128x8xf32>, vector<1x8xf32> -> vector<1x8xf32>
    %cst_27 = arith.constant 3.906250e-03 : f32
    %31 = vector.broadcast %cst_27 : f32 to vector<1x8xf32>
    %32 = arith.mulf %28, %31 : vector<1x8xf32>
    %cst_28 = arith.constant 3.906250e-03 : f32
    %33 = vector.broadcast %cst_28 : f32 to vector<1x8xf32>
    %34 = arith.mulf %30, %33 : vector<1x8xf32>
    %35 = arith.mulf %32, %32 : vector<1x8xf32>
    %36 = arith.subf %34, %35 : vector<1x8xf32>
    %cst_29 = arith.constant 9.99999974E-6 : f32
    %37 = vector.broadcast %cst_29 : f32 to vector<1x8xf32>
    %38 = arith.addf %36, %37 : vector<1x8xf32>
    %39 = math.rsqrt %38 : vector<1x8xf32>
    %c0_30 = arith.constant 0 : index
    %c0_31 = arith.constant 0 : index
    %40 = vector.load %arg7[%c0_30, %c0_31] : memref<8x128xf32, #tpu.memory_space<vmem>>, vector<8x128xf32>
    %cst_32 = arith.constant dense<0.000000e+00> : vector<1x128xf32>
    %41 = tpu.matmul %32, %40, %cst_32 {dimension_numbers = #tpu.dot_dimension_numbers<[1], [0], [0], [1], [0, 0, 1, 1], [], []>} : vector<1x8xf32>, vector<8x128xf32>, vector<1x128xf32> -> vector<1x128xf32>
    %c0_33 = arith.constant 0 : index
    %c0_34 = arith.constant 0 : index
    %42 = vector.load %arg7[%c0_33, %c0_34] : memref<8x128xf32, #tpu.memory_space<vmem>>, vector<8x128xf32>
    %cst_35 = arith.constant dense<0.000000e+00> : vector<1x128xf32>
    %43 = tpu.matmul %39, %42, %cst_35 {dimension_numbers = #tpu.dot_dimension_numbers<[1], [0], [0], [1], [0, 0, 1, 1], [], []>} : vector<1x8xf32>, vector<8x128xf32>, vector<1x128xf32> -> vector<1x128xf32>
    %44 = vector.broadcast %41 : vector<1x128xf32> to vector<16x128xf32>
    %45 = arith.subf %21, %44 : vector<16x128xf32>
    %46 = vector.broadcast %43 : vector<1x128xf32> to vector<16x128xf32>
    %47 = arith.mulf %45, %46 : vector<16x128xf32>
    %cst_36 = arith.constant 0.000000e+00 : f32
    %48 = vector.broadcast %cst_36 : f32 to vector<16x128xf32>
    %49 = arith.maximumf %47, %48 : vector<16x128xf32>
    %cst_37 = arith.constant 0.000000e+00 : f32
    %50 = vector.broadcast %cst_37 : f32 to vector<32x384xf32>
    %c0_38 = arith.constant 0 : index
    %c0_39 = arith.constant 0 : index
    %51 = vector.load %arg11[%c0_38, %c0_39] : memref<32x384xf32, #tpu.memory_space<vmem>>, vector<32x384xf32>
    tpu.vector_store %arg11[%c0_38, %c0_39], %50 {strides = array<i32>} : memref<32x384xf32, #tpu.memory_space<vmem>>, vector<32x384xf32>,
    %c8_40 = arith.constant 8 : index
    %c128_41 = arith.constant 128 : index
    %52 = vector.load %arg11[%c8_40, %c128_41] : memref<32x384xf32, #tpu.memory_space<vmem>>, vector<16x128xf32>
    tpu.vector_store %arg11[%c8_40, %c128_41], %49 {strides = array<i32>} : memref<32x384xf32, #tpu.memory_space<vmem>>, vector<16x128xf32>,
    %c7_42 = arith.constant 7 : index
    %c120 = arith.constant 120 : index
    %53 = vector.load %arg11[%c7_42, %c120] : memref<32x384xf32, #tpu.memory_space<vmem>>, vector<16x144xf32>
    %c0_43 = arith.constant 0 : index
    %c0_44 = arith.constant 0 : index
    %c0_45 = arith.constant 0 : index
    %54 = vector.load %arg4[%c0_43, %c0_44, %c0_45] : memref<3x144x128xf32, #tpu.memory_space<vmem>>, vector<1x144x128xf32>
    %55 = vector.shape_cast %54 : vector<1x144x128xf32> to vector<144x128xf32>
    %cst_46 = arith.constant dense<0.000000e+00> : vector<16x128xf32>
    %56 = tpu.matmul %53, %55, %cst_46 {dimension_numbers = #tpu.dot_dimension_numbers<[1], [0], [0], [1], [0, 0, 1, 1], [], []>} : vector<16x144xf32>, vector<144x128xf32>, vector<16x128xf32> -> vector<16x128xf32>
    %c8_47 = arith.constant 8 : index
    %c120_48 = arith.constant 120 : index
    %57 = vector.load %arg11[%c8_47, %c120_48] : memref<32x384xf32, #tpu.memory_space<vmem>>, vector<16x144xf32>
    %c1_49 = arith.constant 1 : index
    %c0_50 = arith.constant 0 : index
    %c0_51 = arith.constant 0 : index
    %58 = vector.load %arg4[%c1_49, %c0_50, %c0_51] : memref<3x144x128xf32, #tpu.memory_space<vmem>>, vector<1x144x128xf32>
    %59 = vector.shape_cast %58 : vector<1x144x128xf32> to vector<144x128xf32>
    %cst_52 = arith.constant dense<0.000000e+00> : vector<16x128xf32>
    %60 = tpu.matmul %57, %59, %cst_52 {dimension_numbers = #tpu.dot_dimension_numbers<[1], [0], [0], [1], [0, 0, 1, 1], [], []>} : vector<16x144xf32>, vector<144x128xf32>, vector<16x128xf32> -> vector<16x128xf32>
    %61 = arith.addf %56, %60 : vector<16x128xf32>
    %c9_53 = arith.constant 9 : index
    %c120_54 = arith.constant 120 : index
    %62 = vector.load %arg11[%c9_53, %c120_54] : memref<32x384xf32, #tpu.memory_space<vmem>>, vector<16x144xf32>
    %c2_55 = arith.constant 2 : index
    %c0_56 = arith.constant 0 : index
    %c0_57 = arith.constant 0 : index
    %63 = vector.load %arg4[%c2_55, %c0_56, %c0_57] : memref<3x144x128xf32, #tpu.memory_space<vmem>>, vector<1x144x128xf32>
    %64 = vector.shape_cast %63 : vector<1x144x128xf32> to vector<144x128xf32>
    %cst_58 = arith.constant dense<0.000000e+00> : vector<16x128xf32>
    %65 = tpu.matmul %62, %64, %cst_58 {dimension_numbers = #tpu.dot_dimension_numbers<[1], [0], [0], [1], [0, 0, 1, 1], [], []>} : vector<16x144xf32>, vector<144x128xf32>, vector<16x128xf32> -> vector<16x128xf32>
    %66 = arith.addf %61, %65 : vector<16x128xf32>
    %c0_59 = arith.constant 0 : index
    %c0_60 = arith.constant 0 : index
    %67 = vector.load %arg5[%c0_59, %c0_60] : memref<1x128xf32, #tpu.memory_space<vmem>>, vector<1x128xf32>
    %68 = vector.broadcast %67 : vector<1x128xf32> to vector<16x128xf32>
    %69 = arith.addf %66, %68 : vector<16x128xf32>
    %cst_61 = arith.constant dense<0.000000e+00> : vector<128xf32>
    %70 = vector.multi_reduction <add>, %69, %cst_61 [0] : vector<16x128xf32> to vector<128xf32>
    %71 = vector.shape_cast %70 : vector<128xf32> to vector<1x128xf32>
    %72 = arith.mulf %69, %69 : vector<16x128xf32>
    %cst_62 = arith.constant dense<0.000000e+00> : vector<128xf32>
    %73 = vector.multi_reduction <add>, %72, %cst_62 [0] : vector<16x128xf32> to vector<128xf32>
    %74 = vector.shape_cast %73 : vector<128xf32> to vector<1x128xf32>
    %c0_63 = arith.constant 0 : index
    %c0_64 = arith.constant 0 : index
    %75 = vector.load %arg6[%c0_63, %c0_64] : memref<128x8xf32, #tpu.memory_space<vmem>>, vector<128x8xf32>
    %cst_65 = arith.constant dense<0.000000e+00> : vector<1x8xf32>
    %76 = tpu.matmul %71, %75, %cst_65 {dimension_numbers = #tpu.dot_dimension_numbers<[1], [0], [0], [1], [0, 0, 1, 1], [], []>} : vector<1x128xf32>, vector<128x8xf32>, vector<1x8xf32> -> vector<1x8xf32>
    %c0_66 = arith.constant 0 : index
    %c0_67 = arith.constant 0 : index
    %77 = vector.load %arg6[%c0_66, %c0_67] : memref<128x8xf32, #tpu.memory_space<vmem>>, vector<128x8xf32>
    %cst_68 = arith.constant dense<0.000000e+00> : vector<1x8xf32>
    %78 = tpu.matmul %74, %77, %cst_68 {dimension_numbers = #tpu.dot_dimension_numbers<[1], [0], [0], [1], [0, 0, 1, 1], [], []>} : vector<1x128xf32>, vector<128x8xf32>, vector<1x8xf32> -> vector<1x8xf32>
    %cst_69 = arith.constant 3.906250e-03 : f32
    %79 = vector.broadcast %cst_69 : f32 to vector<1x8xf32>
    %80 = arith.mulf %76, %79 : vector<1x8xf32>
    %cst_70 = arith.constant 3.906250e-03 : f32
    %81 = vector.broadcast %cst_70 : f32 to vector<1x8xf32>
    %82 = arith.mulf %78, %81 : vector<1x8xf32>
    %83 = arith.mulf %80, %80 : vector<1x8xf32>
    %84 = arith.subf %82, %83 : vector<1x8xf32>
    %cst_71 = arith.constant 9.99999974E-6 : f32
    %85 = vector.broadcast %cst_71 : f32 to vector<1x8xf32>
    %86 = arith.addf %84, %85 : vector<1x8xf32>
    %87 = math.rsqrt %86 : vector<1x8xf32>
    %c0_72 = arith.constant 0 : index
    %c0_73 = arith.constant 0 : index
    %88 = vector.load %arg7[%c0_72, %c0_73] : memref<8x128xf32, #tpu.memory_space<vmem>>, vector<8x128xf32>
    %cst_74 = arith.constant dense<0.000000e+00> : vector<1x128xf32>
    %89 = tpu.matmul %80, %88, %cst_74 {dimension_numbers = #tpu.dot_dimension_numbers<[1], [0], [0], [1], [0, 0, 1, 1], [], []>} : vector<1x8xf32>, vector<8x128xf32>, vector<1x128xf32> -> vector<1x128xf32>
    %c0_75 = arith.constant 0 : index
    %c0_76 = arith.constant 0 : index
    %90 = vector.load %arg7[%c0_75, %c0_76] : memref<8x128xf32, #tpu.memory_space<vmem>>, vector<8x128xf32>
    %cst_77 = arith.constant dense<0.000000e+00> : vector<1x128xf32>
    %91 = tpu.matmul %87, %90, %cst_77 {dimension_numbers = #tpu.dot_dimension_numbers<[1], [0], [0], [1], [0, 0, 1, 1], [], []>} : vector<1x8xf32>, vector<8x128xf32>, vector<1x128xf32> -> vector<1x128xf32>
    %92 = vector.broadcast %89 : vector<1x128xf32> to vector<16x128xf32>
    %93 = arith.subf %69, %92 : vector<16x128xf32>
    %94 = vector.broadcast %91 : vector<1x128xf32> to vector<16x128xf32>
    %95 = arith.mulf %93, %94 : vector<16x128xf32>
    %c0_78 = arith.constant 0 : index
    %c0_79 = arith.constant 0 : index
    %96 = vector.load %arg8[%c0_78, %c0_79] : memref<64x128xf32, #tpu.memory_space<vmem>>, vector<64x128xf32>
    %cst_80 = arith.constant dense<0.000000e+00> : vector<16x128xf32>
    %97 = tpu.matmul %1, %96, %cst_80 {dimension_numbers = #tpu.dot_dimension_numbers<[1], [0], [0], [1], [0, 0, 1, 1], [], []>} : vector<16x64xf32>, vector<64x128xf32>, vector<16x128xf32> -> vector<16x128xf32>
    %cst_81 = arith.constant dense<0.000000e+00> : vector<128xf32>
    %98 = vector.multi_reduction <add>, %97, %cst_81 [0] : vector<16x128xf32> to vector<128xf32>
    %99 = vector.shape_cast %98 : vector<128xf32> to vector<1x128xf32>
    %100 = arith.mulf %97, %97 : vector<16x128xf32>
    %cst_82 = arith.constant dense<0.000000e+00> : vector<128xf32>
    %101 = vector.multi_reduction <add>, %100, %cst_82 [0] : vector<16x128xf32> to vector<128xf32>
    %102 = vector.shape_cast %101 : vector<128xf32> to vector<1x128xf32>
    %c0_83 = arith.constant 0 : index
    %c0_84 = arith.constant 0 : index
    %103 = vector.load %arg6[%c0_83, %c0_84] : memref<128x8xf32, #tpu.memory_space<vmem>>, vector<128x8xf32>
    %cst_85 = arith.constant dense<0.000000e+00> : vector<1x8xf32>
    %104 = tpu.matmul %99, %103, %cst_85 {dimension_numbers = #tpu.dot_dimension_numbers<[1], [0], [0], [1], [0, 0, 1, 1], [], []>} : vector<1x128xf32>, vector<128x8xf32>, vector<1x8xf32> -> vector<1x8xf32>
    %c0_86 = arith.constant 0 : index
    %c0_87 = arith.constant 0 : index
    %105 = vector.load %arg6[%c0_86, %c0_87] : memref<128x8xf32, #tpu.memory_space<vmem>>, vector<128x8xf32>
    %cst_88 = arith.constant dense<0.000000e+00> : vector<1x8xf32>
    %106 = tpu.matmul %102, %105, %cst_88 {dimension_numbers = #tpu.dot_dimension_numbers<[1], [0], [0], [1], [0, 0, 1, 1], [], []>} : vector<1x128xf32>, vector<128x8xf32>, vector<1x8xf32> -> vector<1x8xf32>
    %cst_89 = arith.constant 3.906250e-03 : f32
    %107 = vector.broadcast %cst_89 : f32 to vector<1x8xf32>
    %108 = arith.mulf %104, %107 : vector<1x8xf32>
    %cst_90 = arith.constant 3.906250e-03 : f32
    %109 = vector.broadcast %cst_90 : f32 to vector<1x8xf32>
    %110 = arith.mulf %106, %109 : vector<1x8xf32>
    %111 = arith.mulf %108, %108 : vector<1x8xf32>
    %112 = arith.subf %110, %111 : vector<1x8xf32>
    %cst_91 = arith.constant 9.99999974E-6 : f32
    %113 = vector.broadcast %cst_91 : f32 to vector<1x8xf32>
    %114 = arith.addf %112, %113 : vector<1x8xf32>
    %115 = math.rsqrt %114 : vector<1x8xf32>
    %c0_92 = arith.constant 0 : index
    %c0_93 = arith.constant 0 : index
    %116 = vector.load %arg7[%c0_92, %c0_93] : memref<8x128xf32, #tpu.memory_space<vmem>>, vector<8x128xf32>
    %cst_94 = arith.constant dense<0.000000e+00> : vector<1x128xf32>
    %117 = tpu.matmul %108, %116, %cst_94 {dimension_numbers = #tpu.dot_dimension_numbers<[1], [0], [0], [1], [0, 0, 1, 1], [], []>} : vector<1x8xf32>, vector<8x128xf32>, vector<1x128xf32> -> vector<1x128xf32>
    %c0_95 = arith.constant 0 : index
    %c0_96 = arith.constant 0 : index
    %118 = vector.load %arg7[%c0_95, %c0_96] : memref<8x128xf32, #tpu.memory_space<vmem>>, vector<8x128xf32>
    %cst_97 = arith.constant dense<0.000000e+00> : vector<1x128xf32>
    %119 = tpu.matmul %115, %118, %cst_97 {dimension_numbers = #tpu.dot_dimension_numbers<[1], [0], [0], [1], [0, 0, 1, 1], [], []>} : vector<1x8xf32>, vector<8x128xf32>, vector<1x128xf32> -> vector<1x128xf32>
    %120 = vector.broadcast %117 : vector<1x128xf32> to vector<16x128xf32>
    %121 = arith.subf %97, %120 : vector<16x128xf32>
    %122 = vector.broadcast %119 : vector<1x128xf32> to vector<16x128xf32>
    %123 = arith.mulf %121, %122 : vector<16x128xf32>
    %124 = arith.addf %95, %123 : vector<16x128xf32>
    %cst_98 = arith.constant 0.000000e+00 : f32
    %125 = vector.broadcast %cst_98 : f32 to vector<16x128xf32>
    %126 = arith.maximumf %124, %125 : vector<16x128xf32>
    %c0_99 = arith.constant 0 : index
    %c0_100 = arith.constant 0 : index
    %c0_101 = arith.constant 0 : index
    %127 = vector.load %arg9[%c0_99, %c0_100, %c0_101] : memref<1x16x128xf32, #tpu.memory_space<vmem>>, vector<1x16x128xf32>
    %128 = vector.shape_cast %127 : vector<1x16x128xf32> to vector<16x128xf32>
    %129 = vector.shape_cast %126 : vector<16x128xf32> to vector<1x16x128xf32>
    tpu.vector_store %arg9[%c0_99, %c0_100, %c0_101], %129 {strides = array<i32>} : memref<1x16x128xf32, #tpu.memory_space<vmem>>, vector<1x16x128xf32>,
    return
  }
  func.func @transform_0(%arg0: i32) -> (i32, i32, i32) {
    %c0_i32 = arith.constant 0 : i32
    %c0_i32_0 = arith.constant 0 : i32
    %c0_i32_1 = arith.constant 0 : i32
    return %arg0, %c0_i32, %c0_i32_0 : i32, i32, i32
  }
  func.func @transform_1(%arg0: i32) -> (i32, i32, i32) {
    %c0_i32 = arith.constant 0 : i32
    %c0_i32_0 = arith.constant 0 : i32
    %c0_i32_1 = arith.constant 0 : i32
    %c0_i32_2 = arith.constant 0 : i32
    return %c0_i32, %c0_i32_0, %c0_i32_1 : i32, i32, i32
  }
  func.func @transform_2(%arg0: i32) -> (i32, i32) {
    %c0_i32 = arith.constant 0 : i32
    %c0_i32_0 = arith.constant 0 : i32
    %c0_i32_1 = arith.constant 0 : i32
    return %c0_i32, %c0_i32_0 : i32, i32
  }
  func.func @transform_3(%arg0: i32) -> (i32, i32, i32) {
    %c0_i32 = arith.constant 0 : i32
    %c0_i32_0 = arith.constant 0 : i32
    %c0_i32_1 = arith.constant 0 : i32
    %c0_i32_2 = arith.constant 0 : i32
    return %c0_i32, %c0_i32_0, %c0_i32_1 : i32, i32, i32
  }
  func.func @transform_4(%arg0: i32) -> (i32, i32) {
    %c0_i32 = arith.constant 0 : i32
    %c0_i32_0 = arith.constant 0 : i32
    %c0_i32_1 = arith.constant 0 : i32
    return %c0_i32, %c0_i32_0 : i32, i32
  }
  func.func @transform_5(%arg0: i32) -> (i32, i32) {
    %c0_i32 = arith.constant 0 : i32
    %c0_i32_0 = arith.constant 0 : i32
    %c0_i32_1 = arith.constant 0 : i32
    return %c0_i32, %c0_i32_0 : i32, i32
  }
  func.func @transform_6(%arg0: i32) -> (i32, i32) {
    %c0_i32 = arith.constant 0 : i32
    %c0_i32_0 = arith.constant 0 : i32
    %c0_i32_1 = arith.constant 0 : i32
    return %c0_i32, %c0_i32_0 : i32, i32
  }
  func.func @transform_7(%arg0: i32) -> (i32, i32) {
    %c0_i32 = arith.constant 0 : i32
    %c0_i32_0 = arith.constant 0 : i32
    %c0_i32_1 = arith.constant 0 : i32
    return %c0_i32, %c0_i32_0 : i32, i32
  }
  func.func @transform_8(%arg0: i32) -> (i32, i32, i32) {
    %c0_i32 = arith.constant 0 : i32
    %c0_i32_0 = arith.constant 0 : i32
    %c0_i32_1 = arith.constant 0 : i32
    return %arg0, %c0_i32, %c0_i32_0 : i32, i32, i32
  }
}

</mosaic_0001>

<llo_original>
// kernel: tpu_custom_call.1
$region0: #{tpu_custom_call.1}
  #allocation0 [shape = 'u32[]', space=smem, size = 0x4, offset = 0x4, fixed_abs, tag = 'smem constant byte address 0x4 - core index']
  #allocation1 [shape = 'u32[144,128]{1,0:T(1,128)}', space=vmem, size = 0x12000, scoped, tag = 'internal scratch']
  #allocation2 [shape = 'f32[32,320]{1,0:T(8,128)}', space=vmem, size = 0xc000, scoped, tag = 'scratch operand']
  #allocation3 [shape = 'f32[32,384]{1,0:T(8,128)}', space=vmem, size = 0xc000, scoped, tag = 'scratch operand']
  %s0 = inlined_call_operand.vmem [shape: f32[2,16,64], index: 0, kind: input, shape index: {}]
  %s1 = inlined_call_operand.hbm [shape: f32[3,72,128], index: 1, kind: input, shape index: {}]
  %s2 = inlined_call_operand.vmem [shape: f32[1,128], index: 2, kind: input, shape index: {}]
  %s3 = inlined_call_operand.hbm [shape: f32[3,144,128], index: 3, kind: input, shape index: {}]
  %s4 = inlined_call_operand.vmem [shape: f32[1,128], index: 4, kind: input, shape index: {}]
  %s5 = inlined_call_operand.vmem [shape: f32[128,8], index: 5, kind: input, shape index: {}]
  %s6 = inlined_call_operand.vmem [shape: f32[8,128], index: 6, kind: input, shape index: {}]
  %s7 = inlined_call_operand.vmem [shape: f32[64,128], index: 7, kind: input, shape index: {}]
  %s8 = inlined_call_operand.hbm [shape: f32[2,16,128], index: 8, kind: output, shape index: {}]
  %s9 = sld [smem:[#allocation0]]
  $region73: #{tpu_custom_call.1} parent=0
    _
  %s11 = ssub.s32 1, %s9
  %s12 = scalar_select 0, %s11, %s9
  $region1: #{tpu_custom_call.1} parent=0
    #allocation4 [shape = 'u8[110592]{0}', space=vmem, size = 0x1b000, scoped, tag = 'input window, operand 1, single buffered']
    #allocation5 [shape = 's32[2]{0}', space=sflag, size = 0x8, scoped, tag = 'scoped memory for tpu_custom_call.1']
    #allocation6 [shape = 's32[2]{0}', space=sflag, size = 0x8, scoped, tag = 'scoped memory for tpu_custom_call.1']
    #allocation7 [shape = 'u8[221184]{0}', space=vmem, size = 0x36000, scoped, tag = 'input window, operand 3, single buffered']
    #allocation8 [shape = 's32[1]{0}', space=sflag, size = 0x4, scoped, tag = 'scoped memory for tpu_custom_call.1']
    #allocation9 [shape = 'u8[16384]{0}', space=vmem, size = 0x4000, scoped, tag = 'output window, operand 0']
    %13 = vsyncpa [#allocation5], 0
    %14 = vsyncpa [#allocation8], 0
    %15 = vsyncpa [#allocation6], 0
    %s16 = scalar_lea.sflag [#allocation6], 1
    %17 = vsyncpa %s16, 0
    loop: start=0, step=1, limit=4
    $region2: #{tpu_custom_call.1} parent=1 // loop_pre_header
      _
    $region3: #{tpu_custom_call.1} parent=1 // loop_header
      %s19 = sphi 0, %s23
      %p20 = scmp.ge.s32.totalorder %s19, 4
      %s29 = sphi 0, %s31
      %s32 = sphi 0, %s29
      %s33 = sphi 0, %s32
      %s49 = sphi 0, %s33
      %s53 = sphi 0, %s53
      %s55 = sphi 0, %s53
      %s56 = sphi 0, %s55
      %s70 = sphi 0, %s56
      %s74 = sphi 0, %s74
      %s76 = sphi 0, %s74
      %s77 = sphi 0, %s76
      %s91 = sphi 0, %s77
      %s95 = sphi 0, %s95
      %s97 = sphi 0, %s95
      %s98 = sphi 0, %s97
      %s112 = sphi 0, %s98
      %s116 = sphi 0, %s116
      %s118 = sphi 0, %s116
      %s119 = sphi 0, %s118
      %s133 = sphi 0, %s119
      %s137 = sphi 0, %s137
      %s139 = sphi 0, %s137
      %s140 = sphi 0, %s139
      %s154 = sphi 0, %s140
      %s158 = sphi 0, %s158
      %s160 = sphi 0, %s158
      %s161 = sphi 0, %s160
      %s175 = sphi 0, %s161
      %s179 = sphi 0, %s179
      %s181 = sphi 0, %s179
      %s182 = sphi 0, %s181
      %s196 = sphi 0, %s182
      %s202 = sphi 0, %s204
      %s205 = sphi 0, %s202
      %s206 = sphi 0, %s205
      %s222 = sphi 0, %s206
    $region4: #{tpu_custom_call.1} parent=1 // loop_header_branch
      %22 = sbr.rel (%p20) target = $region8
    $region5: #{tpu_custom_call.1} parent=1 // loop_body
      %s24 = ssub.s32 %s19, 1
      %s25 = ssub.s32 %s19, 2
      %s26 = sadd.s32 %s19, 1
      %s27 = ssub.s32 %s19, %s26
      %p28 = scmp.eq.s32.totalorder %s27, 0
      %s30 = sadd.s32 %s29, 1
      %s31 = scalar_select %p28, %s29, %s30
      %p34 = pneg %p28
      %p35 = scmp.eq.s32.totalorder %s19, 1
      %p36 = por %p34, %p35
      %p37 = scmp.ne.s32.totalorder %s29, %s32
      %p38 = scmp.eq.s32.totalorder %s19, 0
      %p39 = por %p37, %p38
      %p40 = scmp.ne.s32.totalorder %s29, %s32
      %p41 = scmp.eq.s32.totalorder %s24, 1
      %p42 = por %p40, %p41
      %p43 = scmp.ne.s32.totalorder %s32, %s33
      %p44 = scmp.eq.s32.totalorder %s24, 0
      %p45 = por %p43, %p44
      %p46 = scmp.ne.s32.totalorder %s32, %s33
      %p47 = scmp.eq.s32.totalorder %s25, 1
      %p48 = por %p46, %p47
      %p50 = scmp.ne.s32.totalorder %s33, %s49
      %p51 = scmp.eq.s32.totalorder %s25, 0
      %p52 = por %p50, %p51
      %s54 = sadd.s32 %s53, 1
      %p57 = scmp.eq.s32.totalorder %s19, 1
      %p58 = scmp.ne.s32.totalorder %s53, %s55
      %p59 = scmp.eq.s32.totalorder %s19, 0
      %p60 = por %p58, %p59
      %p61 = scmp.ne.s32.totalorder %s53, %s55
      %p62 = scmp.eq.s32.totalorder %s24, 1
      %p63 = por %p61, %p62
      %p64 = scmp.ne.s32.totalorder %s55, %s56
      %p65 = scmp.eq.s32.totalorder %s24, 0
      %p66 = por %p64, %p65
      %p67 = scmp.ne.s32.totalorder %s55, %s56
      %p68 = scmp.eq.s32.totalorder %s25, 1
      %p69 = por %p67, %p68
      %p71 = scmp.ne.s32.totalorder %s56, %s70
      %p72 = scmp.eq.s32.totalorder %s25, 0
      %p73 = por %p71, %p72
      %s75 = sadd.s32 %s74, 1
      %p78 = scmp.eq.s32.totalorder %s19, 1
      %p79 = scmp.ne.s32.totalorder %s74, %s76
      %p80 = scmp.eq.s32.totalorder %s19, 0
      %p81 = por %p79, %p80
      %p82 = scmp.ne.s32.totalorder %s74, %s76
      %p83 = scmp.eq.s32.totalorder %s24, 1
      %p84 = por %p82, %p83
      %p85 = scmp.ne.s32.totalorder %s76, %s77
      %p86 = scmp.eq.s32.totalorder %s24, 0
      %p87 = por %p85, %p86
      %p88 = scmp.ne.s32.totalorder %s76, %s77
      %p89 = scmp.eq.s32.totalorder %s25, 1
      %p90 = por %p88, %p89
      %p92 = scmp.ne.s32.totalorder %s77, %s91
      %p93 = scmp.eq.s32.totalorder %s25, 0
      %p94 = por %p92, %p93
      %s96 = sadd.s32 %s95, 1
      %p99 = scmp.eq.s32.totalorder %s19, 1
      %p100 = scmp.ne.s32.totalorder %s95, %s97
      %p101 = scmp.eq.s32.totalorder %s19, 0
      %p102 = por %p100, %p101
      %p103 = scmp.ne.s32.totalorder %s95, %s97
      %p104 = scmp.eq.s32.totalorder %s24, 1
      %p105 = por %p103, %p104
      %p106 = scmp.ne.s32.totalorder %s97, %s98
      %p107 = scmp.eq.s32.totalorder %s24, 0
      %p108 = por %p106, %p107
      %p109 = scmp.ne.s32.totalorder %s97, %s98
      %p110 = scmp.eq.s32.totalorder %s25, 1
      %p111 = por %p109, %p110
      %p113 = scmp.ne.s32.totalorder %s98, %s112
      %p114 = scmp.eq.s32.totalorder %s25, 0
      %p115 = por %p113, %p114
      %s117 = sadd.s32 %s116, 1
      %p120 = scmp.eq.s32.totalorder %s19, 1
      %p121 = scmp.ne.s32.totalorder %s116, %s118
      %p122 = scmp.eq.s32.totalorder %s19, 0
      %p123 = por %p121, %p122
      %p124 = scmp.ne.s32.totalorder %s116, %s118
      %p125 = scmp.eq.s32.totalorder %s24, 1
      %p126 = por %p124, %p125
      %p127 = scmp.ne.s32.totalorder %s118, %s119
      %p128 = scmp.eq.s32.totalorder %s24, 0
      %p129 = por %p127, %p128
      %p130 = scmp.ne.s32.totalorder %s118, %s119
      %p131 = scmp.eq.s32.totalorder %s25, 1
      %p132 = por %p130, %p131
      %p134 = scmp.ne.s32.totalorder %s119, %s133
      %p135 = scmp.eq.s32.totalorder %s25, 0
      %p136 = por %p134, %p135
      %s138 = sadd.s32 %s137, 1
      %p141 = scmp.eq.s32.totalorder %s19, 1
      %p142 = scmp.ne.s32.totalorder %s137, %s139
      %p143 = scmp.eq.s32.totalorder %s19, 0
      %p144 = por %p142, %p143
      %p145 = scmp.ne.s32.totalorder %s137, %s139
      %p146 = scmp.eq.s32.totalorder %s24, 1
      %p147 = por %p145, %p146
      %p148 = scmp.ne.s32.totalorder %s139, %s140
      %p149 = scmp.eq.s32.totalorder %s24, 0
      %p150 = por %p148, %p149
      %p151 = scmp.ne.s32.totalorder %s139, %s140
      %p152 = scmp.eq.s32.totalorder %s25, 1
      %p153 = por %p151, %p152
      %p155 = scmp.ne.s32.totalorder %s140, %s154
      %p156 = scmp.eq.s32.totalorder %s25, 0
      %p157 = por %p155, %p156
      %s159 = sadd.s32 %s158, 1
      %p162 = scmp.eq.s32.totalorder %s19, 1
      %p163 = scmp.ne.s32.totalorder %s158, %s160
      %p164 = scmp.eq.s32.totalorder %s19, 0
      %p165 = por %p163, %p164
      %p166 = scmp.ne.s32.totalorder %s158, %s160
      %p167 = scmp.eq.s32.totalorder %s24, 1
      %p168 = por %p166, %p167
      %p169 = scmp.ne.s32.totalorder %s160, %s161
      %p170 = scmp.eq.s32.totalorder %s24, 0
      %p171 = por %p169, %p170
      %p172 = scmp.ne.s32.totalorder %s160, %s161
      %p173 = scmp.eq.s32.totalorder %s25, 1
      %p174 = por %p172, %p173
      %p176 = scmp.ne.s32.totalorder %s161, %s175
      %p177 = scmp.eq.s32.totalorder %s25, 0
      %p178 = por %p176, %p177
      %s180 = sadd.s32 %s179, 1
      %p183 = scmp.eq.s32.totalorder %s19, 1
      %p184 = scmp.ne.s32.totalorder %s179, %s181
      %p185 = scmp.eq.s32.totalorder %s19, 0
      %p186 = por %p184, %p185
      %p187 = scmp.ne.s32.totalorder %s179, %s181
      %p188 = scmp.eq.s32.totalorder %s24, 1
      %p189 = por %p187, %p188
      %p190 = scmp.ne.s32.totalorder %s181, %s182
      %p191 = scmp.eq.s32.totalorder %s24, 0
      %p192 = por %p190, %p191
      %p193 = scmp.ne.s32.totalorder %s181, %s182
      %p194 = scmp.eq.s32.totalorder %s25, 1
      %p195 = por %p193, %p194
      %p197 = scmp.ne.s32.totalorder %s182, %s196
      %p198 = scmp.eq.s32.totalorder %s25, 0
      %p199 = por %p197, %p198
      %s200 = ssub.s32 %s19, %s26
      %p201 = scmp.eq.s32.totalorder %s200, 0
      %s203 = sadd.s32 %s202, 1
      %s204 = scalar_select %p201, %s202, %s203
      %p207 = pneg %p201
      %p208 = scmp.eq.s32.totalorder %s19, 1
      %p209 = por %p207, %p208
      %p210 = scmp.ne.s32.totalorder %s202, %s205
      %p211 = scmp.eq.s32.totalorder %s19, 0
      %p212 = por %p210, %p211
      %p213 = scmp.ne.s32.totalorder %s202, %s205
      %p214 = scmp.eq.s32.totalorder %s24, 1
      %p215 = por %p213, %p214
      %p216 = scmp.ne.s32.totalorder %s205, %s206
      %p217 = scmp.eq.s32.totalorder %s24, 0
      %p218 = por %p216, %p217
      %p219 = scmp.ne.s32.totalorder %s205, %s206
      %p220 = scmp.eq.s32.totalorder %s25, 1
      %p221 = por %p219, %p220
      %p223 = scmp.ne.s32.totalorder %s206, %s222
      %p224 = scmp.eq.s32.totalorder %s25, 0
      %p225 = por %p223, %p224
      %p226 = scmp.le.s32.totalorder 1, %s19
      %p227 = scmp.lt.s32.totalorder %s19, 3
      %p228 = pnand %p226, %p227
      %p229 = pneg %p228
      // Predicated region
      $region9: #{tpu_custom_call.1} parent=5 // pred_check
        _
      $region10: #{tpu_custom_call.1} parent=5 // pred_check_branch
        %231 = sbr.rel (%p228) target = $region12
      $region11: #{tpu_custom_call.1} parent=5 // pred_region
        %s232 = ssub.s32 %s19, 1
        // Predicated region
        $region13: #{tpu_custom_call.1} parent=11 // pred_check
          %p233 = pneg %p66
        $region14: #{tpu_custom_call.1} parent=11 // pred_check_branch
          %235 = sbr.rel (%p233) target = $region16
        $region15: #{tpu_custom_call.1} parent=11 // pred_region
          %s237 = ssub.s32 3456, 3456
          %238 = vsyncadd [#allocation5], %s237
          %s239 = sshll.u32 [#allocation4], 4
          %s240 = int_to_ptr.vmem [resolvable:$true] %s239
          %245 = dma.hbm_to_vmem [thread:$0]  %s1, 3456, %s240, [#allocation5], 128, 128, 8
        $region16: #{tpu_custom_call.1} parent=11 // pred_fallthru
          _
        // Predicated region
        $region17: #{tpu_custom_call.1} parent=11 // pred_check
          %p246 = pneg %p87
        $region18: #{tpu_custom_call.1} parent=11 // pred_check_branch
          %248 = sbr.rel (%p246) target = $region20
        $region19: #{tpu_custom_call.1} parent=11 // pred_region
          _
        $region20: #{tpu_custom_call.1} parent=11 // pred_fallthru
          _
        // Predicated region
        $region21: #{tpu_custom_call.1} parent=11 // pred_check
          %p249 = pneg %p108
        $region22: #{tpu_custom_call.1} parent=11 // pred_check_branch
          %251 = sbr.rel (%p249) target = $region24
        $region23: #{tpu_custom_call.1} parent=11 // pred_region
          %s253 = ssub.s32 6912, 6912
          %254 = vsyncadd [#allocation8], %s253
          %s255 = sshll.u32 [#allocation7], 4
          %s256 = int_to_ptr.vmem [resolvable:$true] %s255
          %261 = dma.hbm_to_vmem [thread:$0]  %s3, 6912, %s256, [#allocation8], 128, 128, 8
        $region24: #{tpu_custom_call.1} parent=11 // pred_fallthru
          _
        // Predicated region
        $region25: #{tpu_custom_call.1} parent=11 // pred_check
          %p262 = pneg %p129
        $region26: #{tpu_custom_call.1} parent=11 // pred_check_branch
          %264 = sbr.rel (%p262) target = $region28
        $region27: #{tpu_custom_call.1} parent=11 // pred_region
          _
        $region28: #{tpu_custom_call.1} parent=11 // pred_fallthru
          _
        // Predicated region
        $region29: #{tpu_custom_call.1} parent=11 // pred_check
          %p265 = pneg %p150
        $region30: #{tpu_custom_call.1} parent=11 // pred_check_branch
          %267 = sbr.rel (%p265) target = $region32
        $region31: #{tpu_custom_call.1} parent=11 // pred_region
          _
        $region32: #{tpu_custom_call.1} parent=11 // pred_fallthru
          _
        // Predicated region
        $region33: #{tpu_custom_call.1} parent=11 // pred_check
          %p268 = pneg %p171
        $region34: #{tpu_custom_call.1} parent=11 // pred_check_branch
          %270 = sbr.rel (%p268) target = $region36
        $region35: #{tpu_custom_call.1} parent=11 // pred_region
          _
        $region36: #{tpu_custom_call.1} parent=11 // pred_fallthru
          _
        // Predicated region
        $region37: #{tpu_custom_call.1} parent=11 // pred_check
          %p271 = pneg %p192
        $region38: #{tpu_custom_call.1} parent=11 // pred_check_branch
          %273 = sbr.rel (%p271) target = $region40
        $region39: #{tpu_custom_call.1} parent=11 // pred_region
          _
        $region40: #{tpu_custom_call.1} parent=11 // pred_fallthru
          _
      $region12: #{tpu_custom_call.1} parent=5 // pred_fallthru
        _
      %p274 = scmp.lt.s32.totalorder %s19, 2
      // Predicated region
      $region41: #{tpu_custom_call.1} parent=5 // pred_check
        %p275 = pneg %p274
      $region42: #{tpu_custom_call.1} parent=5 // pred_check_branch
        %277 = sbr.rel (%p275) target = $region44
      $region43: #{tpu_custom_call.1} parent=5 // pred_region
        // Predicated region
        $region45: #{tpu_custom_call.1} parent=43 // pred_check
          %p278 = pneg %p39
        $region46: #{tpu_custom_call.1} parent=43 // pred_check_branch
          %280 = sbr.rel (%p278) target = $region48
        $region47: #{tpu_custom_call.1} parent=43 // pred_region
          %p281 = scmp.lt.s32.totalorder %s19, 1
          %s282 = scalar_select %p281, %s19, 1
          %s283 = smul.addr %s282, 2
          %s284 = smul.addr %s283, 8
          %s285 = scalar_lea.vmem %s0, %s284
        $region48: #{tpu_custom_call.1} parent=43 // pred_fallthru
          _
      $region44: #{tpu_custom_call.1} parent=5 // pred_fallthru
        _
      %p286 = scmp.le.s32.totalorder 1, %s19
      %p287 = scmp.lt.s32.totalorder %s19, 3
      %p288 = pnand %p286, %p287
      %p289 = pneg %p288
      // Predicated region
      $region49: #{tpu_custom_call.1} parent=5 // pred_check
        _
      $region50: #{tpu_custom_call.1} parent=5 // pred_check_branch
        %291 = sbr.rel (%p288) target = $region52
      $region51: #{tpu_custom_call.1} parent=5 // pred_region
        %s292 = ssub.s32 %s19, 1
        // Predicated region
        $region53: #{tpu_custom_call.1} parent=51 // pred_check
          %p293 = pneg %p66
        $region54: #{tpu_custom_call.1} parent=51 // pred_check_branch
          %295 = sbr.rel (%p293) target = $region56
        $region55: #{tpu_custom_call.1} parent=51 // pred_region
          %296 = dma.done [#allocation5], 3456
        $region56: #{tpu_custom_call.1} parent=51 // pred_fallthru
          _
        // Predicated region
        $region57: #{tpu_custom_call.1} parent=51 // pred_check
          %p297 = pneg %p108
        $region58: #{tpu_custom_call.1} parent=51 // pred_check_branch
          %299 = sbr.rel (%p297) target = $region60
        $region59: #{tpu_custom_call.1} parent=51 // pred_region
          %300 = dma.done [#allocation8], 6912
        $region60: #{tpu_custom_call.1} parent=51 // pred_fallthru
          _
        %p301 = scmp.lt.s32.totalorder %s24, 1
        %s302 = scalar_select %p301, %s24, 1
        %s303 = smul.addr %s302, 2
        %s304 = smul.addr %s303, 8
        %s305 = scalar_lea.vmem %s0, %s304
        %p306 = pneg %p45
        %p307 = pneg %p42
        %p308 = pneg %p66
        %p309 = pneg %p63
        %p310 = pneg %p87
        %p311 = pneg %p84
        %p312 = pneg %p108
        %p313 = pneg %p105
        %p314 = pneg %p129
        %p315 = pneg %p126
        %p316 = pneg %p150
        %p317 = pneg %p147
        %p318 = pneg %p171
        %p319 = pneg %p168
        %p320 = pneg %p192
        %p321 = pneg %p189
        %p322 = pneg %p218
        %p323 = pneg %p215
        %s324 = sand.u32 %s205, 1
        %s325 = scalar_lea.sflag [#allocation6], %s324
        %s326 = sand.u32 %s205, 1
        %s327 = smul.addr %s326, 16
        %s328 = scalar_lea.vmem [#allocation9], %s327
        %p329 = scmp.lt.s32.totalorder %s24, 1
        %s330 = scalar_select %p329, %s24, 1
        %s331 = smul.addr %s330, 2
        %s332 = smul.addr %s331, 8
        %s333 = scalar_lea.vmem %s0, %s332
        %v334 = vld [vmem:[%s333] sm:$0xff]
        %v335 = vld [vmem:[%s333 + $0x8] sm:$0xff]
        %336 = vst [vmem:[#allocation2] sm:$0xff] 0.0
        %337 = vst [vmem:[#allocation2 + $0x8] sm:$0xff] 0.0
        %vm338 = vcmask 523264
        %339 = vst.msk [vmem:[#allocation2 + $0x10] sm:$0xff] %vm338, 0.0
        %340 = vst [vmem:[#allocation2 + $0x18] sm:$0xff] 0.0
        %341 = vst [vmem:[#allocation2 + $0x20] sm:$0xff] 0.0
        %342 = vst.msk [vmem:[#allocation2 + $0x28] sm:$0xff] %vm338, 0.0
        %343 = vst [vmem:[#allocation2 + $0x30] sm:$0xff] 0.0
        %344 = vst [vmem:[#allocation2 + $0x38] sm:$0xff] 0.0
        %345 = vst.msk [vmem:[#allocation2 + $0x40] sm:$0xff] %vm338, 0.0
        %346 = vst [vmem:[#allocation2 + $0x48] sm:$0xff] 0.0
        %347 = vst [vmem:[#allocation2 + $0x50] sm:$0xff] 0.0
        %348 = vst.msk [vmem:[#allocation2 + $0x58] sm:$0xff] %vm338, 0.0
        %349 = vst.msk [vmem:[#allocation2 + $0x20] sm:$0xff] %vm338, %v334
        %350 = vst.msk [vmem:[#allocation2 + $0x38] sm:$0xff] %vm338, %v335
        %v351 = vld [vmem:[#allocation2] sm:$0x80]
        %v352 = vld [vmem:[#allocation2 + $0x8] sm:$0x80]
        %v353 = vld [vmem:[#allocation2 + $0x18] sm:$0xff]
        %v354 = vld [vmem:[#allocation2 + $0x20] sm:$0xff]
        %v355 = vld [vmem:[#allocation2 + $0x30] sm:$0x7f]
        %v356 = vld [vmem:[#allocation2 + $0x38] sm:$0x7f]
        %v357 = vld [vmem:[#allocation4] sm:$0xff]
        %v358 = vld [vmem:[#allocation4 + $0x8] sm:$0xff]
        %v359 = vld [vmem:[#allocation4 + $0x10] sm:$0xff]
        %v360 = vld [vmem:[#allocation4 + $0x18] sm:$0xff]
        %v361 = vld [vmem:[#allocation4 + $0x20] sm:$0xff]
        %v362 = vld [vmem:[#allocation4 + $0x28] sm:$0xff]
        %v363 = vld [vmem:[#allocation4 + $0x30] sm:$0xff]
        %v364 = vld [vmem:[#allocation4 + $0x38] sm:$0xff]
        %v365 = vld [vmem:[#allocation4 + $0x40] sm:$0xff]
        %v366 = vld [vmem:[#allocation2 + $0x30] sm:$0xff]
        %v367 = vld [vmem:[#allocation2 + $0x38] sm:$0xff]
        %s368 = scalar_lea.vmem [#allocation4], 72
        %v369 = vld [vmem:[%s368] sm:$0xff]
        %v370 = vld [vmem:[%s368 + $0x8] sm:$0xff]
        %v371 = vld [vmem:[%s368 + $0x10] sm:$0xff]
        %v372 = vld [vmem:[%s368 + $0x18] sm:$0xff]
        %v373 = vld [vmem:[%s368 + $0x20] sm:$0xff]
        %v374 = vld [vmem:[%s368 + $0x28] sm:$0xff]
        %v375 = vld [vmem:[%s368 + $0x30] sm:$0xff]
        %v376 = vld [vmem:[%s368 + $0x38] sm:$0xff]
        %v377 = vld [vmem:[%s368 + $0x40] sm:$0xff]
        %382 = vrot.lane.b32.xlu0 %v353, 4
        %v383 = vpop.permute.xlu0 %382
        %384 = vrot.lane.b32.xlu0 %v354, 4
        %v385 = vpop.permute.xlu0 %384
        %386 = vrot.lane.b32.xlu0 %v366, 4
        %v387 = vpop.permute.xlu0 %386
        %388 = vrot.lane.b32.xlu0 %v367, 4
        %v389 = vpop.permute.xlu0 %388
        %vm390 = vcmask 31744
        %v391 = vsel %vm390, %v383, %v385
        %v392 = vsel %vm390, %v387, %v389
        %vm393 = vcmask 588800
        %v394 = vsel %vm393, %v391, 0
        %v396 = vsel %vm393, %v392, 0
        %398 = vmatprep.subr.mxu0 0.0
        %399 = vmatpush1.msra.mxu0 0.0
        %400 = vmatprep.subr.mxu0 0.0
        %401 = vmatpush1.msra.mxu0 0.0
        %402 = vmatprep.subr.mxu0 0.0
        %403 = vmatpush1.msra.mxu0 0.0
        %404 = vmatprep.subr.mxu0 0.0
        %405 = vmatpush1.msra.mxu0 0.0
        %406 = vmatprep.subr.mxu0 0.0
        %407 = vmatpush1.msra.mxu0 0.0
        %408 = vmatprep.subr.mxu0 0.0
        %409 = vmatpush1.msra.mxu0 0.0
        %410 = vmatprep.subr.mxu0 0.0
        %411 = vmatpush1.msra.mxu0 0.0
        %412 = vmatprep.subr.mxu0 0.0
        %413 = vmatpush1.msra.mxu0 %v377
        %414 = vmatprep.subr.mxu0 0.0
        %415 = vmatpush1.msra.mxu0 %v376
        %416 = vmatprep.subr.mxu0 0.0
        %417 = vmatpush1.msra.mxu0 %v375
        %418 = vmatprep.subr.mxu0 0.0
        %419 = vmatpush1.msra.mxu0 %v374
        %420 = vmatprep.subr.mxu0 0.0
        %421 = vmatpush1.msra.mxu0 %v373
        %422 = vmatprep.subr.mxu0 0.0
        %423 = vmatpush1.msra.mxu0 %v372
        %424 = vmatprep.subr.mxu0 0.0
        %425 = vmatpush1.msra.mxu0 %v371
        %426 = vmatprep.subr.mxu0 0.0
        %427 = vmatpush1.msra.mxu0 %v370
        %428 = vmatprep.subr.mxu0 0.0
        %429 = vmatpush1.msra.mxu0 %v369
        %430 = vmatprep.subr.mxu0 0.0
        %431 = vmatpush2.msra.mxu0 0.0
        %432 = vmatprep.subr.mxu0 0.0
        %433 = vmatpush2.msra.mxu0 0.0
        %434 = vmatprep.subr.mxu0 0.0
        %435 = vmatpush2.msra.mxu0 0.0
        %436 = vmatprep.subr.mxu0 0.0
        %437 = vmatpush2.msra.mxu0 0.0
        %438 = vmatprep.subr.mxu0 0.0
        %439 = vmatpush2.msra.mxu0 0.0
        %440 = vmatprep.subr.mxu0 0.0
        %441 = vmatpush2.msra.mxu0 0.0
        %442 = vmatprep.subr.mxu0 0.0
        %443 = vmatpush2.msra.mxu0 0.0
        %444 = vmatprep.subr.mxu0 0.0
        %445 = vmatpush2.msra.mxu0 0.0
        %446 = vmatprep.subr.mxu0 0.0
        %447 = vmatpush2.msra.mxu0 0.0
        %448 = vmatprep.subr.mxu0 0.0
        %449 = vmatpush2.msra.mxu0 0.0
        %450 = vmatprep.subr.mxu0 0.0
        %451 = vmatpush2.msra.mxu0 0.0
        %452 = vmatprep.subr.mxu0 0.0
        %453 = vmatpush2.msra.mxu0 0.0
        %454 = vmatprep.subr.mxu0 0.0
        %455 = vmatpush2.msra.mxu0 0.0
        %456 = vmatprep.subr.mxu0 0.0
        %457 = vmatpush2.msra.mxu0 0.0
        %458 = vmatprep.subr.mxu0 0.0
        %459 = vmatpush2.msra.mxu0 0.0
        %460 = vmatprep.subr.mxu0 0.0
        %461 = vmatpush2.msra.mxu0 0.0
        %462 = vmatprep.mubr.f32.mxu0 0.0
        %463 = vmatmul.mubr.f32.gmra.mxu0 %v394
        %v464 = vpop.f32.mrf.mxu0
        %v465 = vadd.f32 0.0, %v464
        %v466 = vpop.f32.mrf.mxu0
        %467 = vmatprep.mubr.f32.mxu0 0.0
        %468 = vmatmul.mubr.f32.gmra.mxu0 %v396
        %v469 = vpop.f32.mrf.mxu0
        %v470 = vadd.f32 0.0, %v469
        %v471 = vpop.f32.mrf.mxu0
        %472 = vdwg.mxu0
        %vm477 = vcmask 1040384
        %v478 = vrot.slane %v351, 7
        %v479 = vrot.slane %v353, 7
        %v480 = vsel %vm477, %v478, %v479
        %v481 = vrot.slane %v352, 7
        %v482 = vrot.slane %v354, 7
        %v483 = vsel %vm477, %v481, %v482
        %v484 = vrot.slane %v355, 7
        %v485 = vsel %vm477, %v479, %v484
        %v486 = vrot.slane %v356, 7
        %v487 = vsel %vm477, %v482, %v486
        %488 = vrot.lane.b32.xlu0 %v480, 4
        %v489 = vpop.permute.xlu0 %488
        %490 = vrot.lane.b32.xlu0 %v483, 4
        %v491 = vpop.permute.xlu0 %490
        %492 = vrot.lane.b32.xlu0 %v485, 4
        %v493 = vpop.permute.xlu0 %492
        %494 = vrot.lane.b32.xlu0 %v487, 4
        %v495 = vpop.permute.xlu0 %494
        %v496 = vsel %vm390, %v489, %v491
        %v497 = vsel %vm390, %v493, %v495
        %v498 = vsel %vm393, %v496, 0
        %v500 = vsel %vm393, %v497, 0
        %502 = vmatprep.subr.mxu0 0.0
        %503 = vmatpush1.msra.mxu0 0.0
        %504 = vmatprep.subr.mxu0 0.0
        %505 = vmatpush1.msra.mxu0 0.0
        %506 = vmatprep.subr.mxu0 0.0
        %507 = vmatpush1.msra.mxu0 0.0
        %508 = vmatprep.subr.mxu0 0.0
        %509 = vmatpush1.msra.mxu0 0.0
        %510 = vmatprep.subr.mxu0 0.0
        %511 = vmatpush1.msra.mxu0 0.0
        %512 = vmatprep.subr.mxu0 0.0
        %513 = vmatpush1.msra.mxu0 0.0
        %514 = vmatprep.subr.mxu0 0.0
        %515 = vmatpush1.msra.mxu0 0.0
        %516 = vmatprep.subr.mxu0 0.0
        %517 = vmatpush1.msra.mxu0 %v365
        %518 = vmatprep.subr.mxu0 0.0
        %519 = vmatpush1.msra.mxu0 %v364
        %520 = vmatprep.subr.mxu0 0.0
        %521 = vmatpush1.msra.mxu0 %v363
        %522 = vmatprep.subr.mxu0 0.0
        %523 = vmatpush1.msra.mxu0 %v362
        %524 = vmatprep.subr.mxu0 0.0
        %525 = vmatpush1.msra.mxu0 %v361
        %526 = vmatprep.subr.mxu0 0.0
        %527 = vmatpush1.msra.mxu0 %v360
        %528 = vmatprep.subr.mxu0 0.0
        %529 = vmatpush1.msra.mxu0 %v359
        %530 = vmatprep.subr.mxu0 0.0
        %531 = vmatpush1.msra.mxu0 %v358
        %532 = vmatprep.subr.mxu0 0.0
        %533 = vmatpush1.msra.mxu0 %v357
        %534 = vmatprep.subr.mxu0 0.0
        %535 = vmatpush2.msra.mxu0 0.0
        %536 = vmatprep.subr.mxu0 0.0
        %537 = vmatpush2.msra.mxu0 0.0
        %538 = vmatprep.subr.mxu0 0.0
        %539 = vmatpush2.msra.mxu0 0.0
        %540 = vmatprep.subr.mxu0 0.0
        %541 = vmatpush2.msra.mxu0 0.0
        %542 = vmatprep.subr.mxu0 0.0
        %543 = vmatpush2.msra.mxu0 0.0
        %544 = vmatprep.subr.mxu0 0.0
        %545 = vmatpush2.msra.mxu0 0.0
        %546 = vmatprep.subr.mxu0 0.0
        %547 = vmatpush2.msra.mxu0 0.0
        %548 = vmatprep.subr.mxu0 0.0
        %549 = vmatpush2.msra.mxu0 0.0
        %550 = vmatprep.subr.mxu0 0.0
        %551 = vmatpush2.msra.mxu0 0.0
        %552 = vmatprep.subr.mxu0 0.0
        %553 = vmatpush2.msra.mxu0 0.0
        %554 = vmatprep.subr.mxu0 0.0
        %555 = vmatpush2.msra.mxu0 0.0
        %556 = vmatprep.subr.mxu0 0.0
        %557 = vmatpush2.msra.mxu0 0.0
        %558 = vmatprep.subr.mxu0 0.0
        %559 = vmatpush2.msra.mxu0 0.0
        %560 = vmatprep.subr.mxu0 0.0
        %561 = vmatpush2.msra.mxu0 0.0
        %562 = vmatprep.subr.mxu0 0.0
        %563 = vmatpush2.msra.mxu0 0.0
        %564 = vmatprep.subr.mxu0 0.0
        %565 = vmatpush2.msra.mxu0 0.0
        %566 = vmatprep.mubr.f32.mxu0 0.0
        %567 = vmatmul.mubr.f32.gmra.mxu0 %v498
        %v568 = vpop.f32.mrf.mxu0
        %v569 = vadd.f32 %v465, %v568
        %v570 = vpop.f32.mrf.mxu0
        %571 = vmatprep.mubr.f32.mxu0 0.0
        %572 = vmatmul.mubr.f32.gmra.mxu0 %v500
        %v573 = vpop.f32.mrf.mxu0
        %v574 = vadd.f32 %v470, %v573
        %v575 = vpop.f32.mrf.mxu0
        %576 = vdwg.mxu0
        %v577 = vld [vmem:[#allocation2 + $0x18] sm:$0xfe]
        %v578 = vld [vmem:[#allocation2 + $0x20] sm:$0xfe]
        %v579 = vld [vmem:[#allocation2 + $0x30] sm:$0xff]
        %v580 = vld [vmem:[#allocation2 + $0x38] sm:$0xff]
        %v581 = vld [vmem:[#allocation2 + $0x48] sm:$0x1]
        %v582 = vld [vmem:[#allocation2 + $0x50] sm:$0x1]
        %s583 = scalar_lea.vmem [#allocation4], 144
        %v584 = vld [vmem:[%s583] sm:$0xff]
        %v585 = vld [vmem:[%s583 + $0x8] sm:$0xff]
        %v586 = vld [vmem:[%s583 + $0x10] sm:$0xff]
        %v587 = vld [vmem:[%s583 + $0x18] sm:$0xff]
        %v588 = vld [vmem:[%s583 + $0x20] sm:$0xff]
        %v589 = vld [vmem:[%s583 + $0x28] sm:$0xff]
        %v590 = vld [vmem:[%s583 + $0x30] sm:$0xff]
        %v591 = vld [vmem:[%s583 + $0x38] sm:$0xff]
        %v592 = vld [vmem:[%s583 + $0x40] sm:$0xff]
        %vm599 = vcmask 1046528
        %v600 = vrot.slane %v577, 1
        %v601 = vrot.slane %v579, 1
        %v602 = vsel %vm599, %v600, %v601
        %v603 = vrot.slane %v578, 1
        %v604 = vrot.slane %v580, 1
        %v605 = vsel %vm599, %v603, %v604
        %v606 = vrot.slane %v581, 1
        %v607 = vsel %vm599, %v601, %v606
        %v608 = vrot.slane %v582, 1
        %v609 = vsel %vm599, %v604, %v608
        %610 = vrot.lane.b32.xlu0 %v602, 4
        %v611 = vpop.permute.xlu0 %610
        %612 = vrot.lane.b32.xlu0 %v605, 4
        %v613 = vpop.permute.xlu0 %612
        %614 = vrot.lane.b32.xlu0 %v607, 4
        %v615 = vpop.permute.xlu0 %614
        %616 = vrot.lane.b32.xlu0 %v609, 4
        %v617 = vpop.permute.xlu0 %616
        %v618 = vsel %vm390, %v611, %v613
        %v619 = vsel %vm390, %v615, %v617
        %v620 = vsel %vm393, %v618, 0
        %v622 = vsel %vm393, %v619, 0
        %624 = vmatprep.subr.mxu0 0.0
        %625 = vmatpush1.msra.mxu0 0.0
        %626 = vmatprep.subr.mxu0 0.0
        %627 = vmatpush1.msra.mxu0 0.0
        %628 = vmatprep.subr.mxu0 0.0
        %629 = vmatpush1.msra.mxu0 0.0
        %630 = vmatprep.subr.mxu0 0.0
        %631 = vmatpush1.msra.mxu0 0.0
        %632 = vmatprep.subr.mxu0 0.0
        %633 = vmatpush1.msra.mxu0 0.0
        %634 = vmatprep.subr.mxu0 0.0
        %635 = vmatpush1.msra.mxu0 0.0
        %636 = vmatprep.subr.mxu0 0.0
        %637 = vmatpush1.msra.mxu0 0.0
        %638 = vmatprep.subr.mxu0 0.0
        %639 = vmatpush1.msra.mxu0 %v592
        %640 = vmatprep.subr.mxu0 0.0
        %641 = vmatpush1.msra.mxu0 %v591
        %642 = vmatprep.subr.mxu0 0.0
        %643 = vmatpush1.msra.mxu0 %v590
        %644 = vmatprep.subr.mxu0 0.0
        %645 = vmatpush1.msra.mxu0 %v589
        %646 = vmatprep.subr.mxu0 0.0
        %647 = vmatpush1.msra.mxu0 %v588
        %648 = vmatprep.subr.mxu0 0.0
        %649 = vmatpush1.msra.mxu0 %v587
        %650 = vmatprep.subr.mxu0 0.0
        %651 = vmatpush1.msra.mxu0 %v586
        %652 = vmatprep.subr.mxu0 0.0
        %653 = vmatpush1.msra.mxu0 %v585
        %654 = vmatprep.subr.mxu0 0.0
        %655 = vmatpush1.msra.mxu0 %v584
        %656 = vmatprep.subr.mxu0 0.0
        %657 = vmatpush2.msra.mxu0 0.0
        %658 = vmatprep.subr.mxu0 0.0
        %659 = vmatpush2.msra.mxu0 0.0
        %660 = vmatprep.subr.mxu0 0.0
        %661 = vmatpush2.msra.mxu0 0.0
        %662 = vmatprep.subr.mxu0 0.0
        %663 = vmatpush2.msra.mxu0 0.0
        %664 = vmatprep.subr.mxu0 0.0
        %665 = vmatpush2.msra.mxu0 0.0
        %666 = vmatprep.subr.mxu0 0.0
        %667 = vmatpush2.msra.mxu0 0.0
        %668 = vmatprep.subr.mxu0 0.0
        %669 = vmatpush2.msra.mxu0 0.0
        %670 = vmatprep.subr.mxu0 0.0
        %671 = vmatpush2.msra.mxu0 0.0
        %672 = vmatprep.subr.mxu0 0.0
        %673 = vmatpush2.msra.mxu0 0.0
        %674 = vmatprep.subr.mxu0 0.0
        %675 = vmatpush2.msra.mxu0 0.0
        %676 = vmatprep.subr.mxu0 0.0
        %677 = vmatpush2.msra.mxu0 0.0
        %678 = vmatprep.subr.mxu0 0.0
        %679 = vmatpush2.msra.mxu0 0.0
        %680 = vmatprep.subr.mxu0 0.0
        %681 = vmatpush2.msra.mxu0 0.0
        %682 = vmatprep.subr.mxu0 0.0
        %683 = vmatpush2.msra.mxu0 0.0
        %684 = vmatprep.subr.mxu0 0.0
        %685 = vmatpush2.msra.mxu0 0.0
        %686 = vmatprep.subr.mxu0 0.0
        %687 = vmatpush2.msra.mxu0 0.0
        %688 = vmatprep.mubr.f32.mxu0 0.0
        %689 = vmatmul.mubr.f32.gmra.mxu0 %v620
        %v690 = vpop.f32.mrf.mxu0
        %v691 = vadd.f32 0.0, %v690
        %v692 = vpop.f32.mrf.mxu0
        %693 = vmatprep.mubr.f32.mxu0 0.0
        %694 = vmatmul.mubr.f32.gmra.mxu0 %v622
        %v695 = vpop.f32.mrf.mxu0
        %v696 = vadd.f32 0.0, %v695
        %v697 = vpop.f32.mrf.mxu0
        %698 = vdwg.mxu0
        %v699 = vadd.f32 %v569, %v691
        %v700 = vadd.f32 %v574, %v696
        %v701 = vld [vmem:[%s2] sm:$0x1]
        %v703 = vlaneseq
        %v704 = vshrl.u32 %v703, 7
        %v705 = vsub.s32 0, %v704
        %v706 = vrot.slane %v701, %v705
        %v708 = vadd.f32 %v699, %v706
        %v709 = vadd.f32 %v700, %v706
        %v710 = vadd.f32 %v708, %v709
        %v711 = vrot.slane %v710, 4
        %v712 = vadd.f32 %v710, %v711
        %v713 = vrot.slane %v712, 2
        %v714 = vadd.f32 %v712, %v713
        %v715 = vrot.slane %v714, 1
        %v716 = vadd.f32 %v714, %v715
        %v717 = vmul.f32 %v708, %v708
        %v718 = vmul.f32 %v709, %v709
        %v719 = vadd.f32 %v717, %v718
        %v720 = vrot.slane %v719, 4
        %v721 = vadd.f32 %v719, %v720
        %v722 = vrot.slane %v721, 2
        %v723 = vadd.f32 %v721, %v722
        %v724 = vrot.slane %v723, 1
        %v725 = vadd.f32 %v723, %v724
        %v726 = vld [vmem:[%s5] sm:$0xff]
        %v727 = vld [vmem:[%s5 + $0x8] sm:$0xff]
        %v728 = vld [vmem:[%s5 + $0x10] sm:$0xff]
        %v729 = vld [vmem:[%s5 + $0x18] sm:$0xff]
        %v730 = vld [vmem:[%s5 + $0x20] sm:$0xff]
        %v731 = vld [vmem:[%s5 + $0x28] sm:$0xff]
        %v732 = vld [vmem:[%s5 + $0x30] sm:$0xff]
        %v733 = vld [vmem:[%s5 + $0x38] sm:$0xff]
        %v734 = vld [vmem:[%s5 + $0x40] sm:$0xff]
        %v735 = vld [vmem:[%s5 + $0x48] sm:$0xff]
        %v736 = vld [vmem:[%s5 + $0x50] sm:$0xff]
        %v737 = vld [vmem:[%s5 + $0x58] sm:$0xff]
        %v738 = vld [vmem:[%s5 + $0x60] sm:$0xff]
        %v739 = vld [vmem:[%s5 + $0x68] sm:$0xff]
        %v740 = vld [vmem:[%s5 + $0x70] sm:$0xff]
        %v741 = vld [vmem:[%s5 + $0x78] sm:$0xff]
        %742 = vmatprep.subr.mxu0 0.0
        %743 = vmatpush1.msra.mxu0 %v741
        %744 = vmatprep.subr.mxu0 0.0
        %745 = vmatpush1.msra.mxu0 %v740
        %746 = vmatprep.subr.mxu0 0.0
        %747 = vmatpush1.msra.mxu0 %v739
        %748 = vmatprep.subr.mxu0 0.0
        %749 = vmatpush1.msra.mxu0 %v738
        %750 = vmatprep.subr.mxu0 0.0
        %751 = vmatpush1.msra.mxu0 %v737
        %752 = vmatprep.subr.mxu0 0.0
        %753 = vmatpush1.msra.mxu0 %v736
        %754 = vmatprep.subr.mxu0 0.0
        %755 = vmatpush1.msra.mxu0 %v735
        %756 = vmatprep.subr.mxu0 0.0
        %757 = vmatpush1.msra.mxu0 %v734
        %758 = vmatprep.subr.mxu0 0.0
        %759 = vmatpush1.msra.mxu0 %v733
        %760 = vmatprep.subr.mxu0 0.0
        %761 = vmatpush1.msra.mxu0 %v732
        %762 = vmatprep.subr.mxu0 0.0
        %763 = vmatpush1.msra.mxu0 %v731
        %764 = vmatprep.subr.mxu0 0.0
        %765 = vmatpush1.msra.mxu0 %v730
        %766 = vmatprep.subr.mxu0 0.0
        %767 = vmatpush1.msra.mxu0 %v729
        %768 = vmatprep.subr.mxu0 0.0
        %769 = vmatpush1.msra.mxu0 %v728
        %770 = vmatprep.subr.mxu0 0.0
        %771 = vmatpush1.msra.mxu0 %v727
        %772 = vmatprep.subr.mxu0 0.0
        %773 = vmatpush1.msra.mxu0 %v726
        %774 = vmatprep.subr.mxu0 0.0
        %775 = vmatpush2.msra.mxu0 0.0
        %776 = vmatprep.subr.mxu0 0.0
        %777 = vmatpush2.msra.mxu0 0.0
        %778 = vmatprep.subr.mxu0 0.0
        %779 = vmatpush2.msra.mxu0 0.0
        %780 = vmatprep.subr.mxu0 0.0
        %781 = vmatpush2.msra.mxu0 0.0
        %782 = vmatprep.subr.mxu0 0.0
        %783 = vmatpush2.msra.mxu0 0.0
        %784 = vmatprep.subr.mxu0 0.0
        %785 = vmatpush2.msra.mxu0 0.0
        %786 = vmatprep.subr.mxu0 0.0
        %787 = vmatpush2.msra.mxu0 0.0
        %788 = vmatprep.subr.mxu0 0.0
        %789 = vmatpush2.msra.mxu0 0.0
        %790 = vmatprep.subr.mxu0 0.0
        %791 = vmatpush2.msra.mxu0 0.0
        %792 = vmatprep.subr.mxu0 0.0
        %793 = vmatpush2.msra.mxu0 0.0
        %794 = vmatprep.subr.mxu0 0.0
        %795 = vmatpush2.msra.mxu0 0.0
        %796 = vmatprep.subr.mxu0 0.0
        %797 = vmatpush2.msra.mxu0 0.0
        %798 = vmatprep.subr.mxu0 0.0
        %799 = vmatpush2.msra.mxu0 0.0
        %800 = vmatprep.subr.mxu0 0.0
        %801 = vmatpush2.msra.mxu0 0.0
        %802 = vmatprep.subr.mxu0 0.0
        %803 = vmatpush2.msra.mxu0 0.0
        %804 = vmatprep.subr.mxu0 0.0
        %805 = vmatpush2.msra.mxu0 0.0
        %806 = vmatprep.mubr.f32.mxu0 0.0
        %807 = vmatmul.mubr.f32.gmra.mxu0 %v716
        %v808 = vpop.f32.mrf.mxu0
        %v809 = vadd.f32 0.0, %v808
        %v810 = vpop.f32.mrf.mxu0
        %811 = vdwg.mxu0
        %812 = vmatprep.subr.mxu0 0.0
        %813 = vmatpush1.msra.mxu0 %v741
        %814 = vmatprep.subr.mxu0 0.0
        %815 = vmatpush1.msra.mxu0 %v740
        %816 = vmatprep.subr.mxu0 0.0
        %817 = vmatpush1.msra.mxu0 %v739
        %818 = vmatprep.subr.mxu0 0.0
        %819 = vmatpush1.msra.mxu0 %v738
        %820 = vmatprep.subr.mxu0 0.0
        %821 = vmatpush1.msra.mxu0 %v737
        %822 = vmatprep.subr.mxu0 0.0
        %823 = vmatpush1.msra.mxu0 %v736
        %824 = vmatprep.subr.mxu0 0.0
        %825 = vmatpush1.msra.mxu0 %v735
        %826 = vmatprep.subr.mxu0 0.0
        %827 = vmatpush1.msra.mxu0 %v734
        %828 = vmatprep.subr.mxu0 0.0
        %829 = vmatpush1.msra.mxu0 %v733
        %830 = vmatprep.subr.mxu0 0.0
        %831 = vmatpush1.msra.mxu0 %v732
        %832 = vmatprep.subr.mxu0 0.0
        %833 = vmatpush1.msra.mxu0 %v731
        %834 = vmatprep.subr.mxu0 0.0
        %835 = vmatpush1.msra.mxu0 %v730
        %836 = vmatprep.subr.mxu0 0.0
        %837 = vmatpush1.msra.mxu0 %v729
        %838 = vmatprep.subr.mxu0 0.0
        %839 = vmatpush1.msra.mxu0 %v728
        %840 = vmatprep.subr.mxu0 0.0
        %841 = vmatpush1.msra.mxu0 %v727
        %842 = vmatprep.subr.mxu0 0.0
        %843 = vmatpush1.msra.mxu0 %v726
        %844 = vmatprep.subr.mxu0 0.0
        %845 = vmatpush2.msra.mxu0 0.0
        %846 = vmatprep.subr.mxu0 0.0
        %847 = vmatpush2.msra.mxu0 0.0
        %848 = vmatprep.subr.mxu0 0.0
        %849 = vmatpush2.msra.mxu0 0.0
        %850 = vmatprep.subr.mxu0 0.0
        %851 = vmatpush2.msra.mxu0 0.0
        %852 = vmatprep.subr.mxu0 0.0
        %853 = vmatpush2.msra.mxu0 0.0
        %854 = vmatprep.subr.mxu0 0.0
        %855 = vmatpush2.msra.mxu0 0.0
        %856 = vmatprep.subr.mxu0 0.0
        %857 = vmatpush2.msra.mxu0 0.0
        %858 = vmatprep.subr.mxu0 0.0
        %859 = vmatpush2.msra.mxu0 0.0
        %860 = vmatprep.subr.mxu0 0.0
        %861 = vmatpush2.msra.mxu0 0.0
        %862 = vmatprep.subr.mxu0 0.0
        %863 = vmatpush2.msra.mxu0 0.0
        %864 = vmatprep.subr.mxu0 0.0
        %865 = vmatpush2.msra.mxu0 0.0
        %866 = vmatprep.subr.mxu0 0.0
        %867 = vmatpush2.msra.mxu0 0.0
        %868 = vmatprep.subr.mxu0 0.0
        %869 = vmatpush2.msra.mxu0 0.0
        %870 = vmatprep.subr.mxu0 0.0
        %871 = vmatpush2.msra.mxu0 0.0
        %872 = vmatprep.subr.mxu0 0.0
        %873 = vmatpush2.msra.mxu0 0.0
        %874 = vmatprep.subr.mxu0 0.0
        %875 = vmatpush2.msra.mxu0 0.0
        %876 = vmatprep.mubr.f32.mxu0 0.0
        %877 = vmatmul.mubr.f32.gmra.mxu0 %v725
        %v878 = vpop.f32.mrf.mxu0
        %v879 = vadd.f32 0.0, %v878
        %v880 = vpop.f32.mrf.mxu0
        %881 = vdwg.mxu0
        %v882 = vmul.f32 %v809, 0.00390625
        %v883 = vmul.f32 %v879, 0.00390625
        %v884 = vmul.f32 %v882, %v882
        %v885 = vsub.f32 %v883, %v884
        %v886 = vadd.f32 %v885, 1e-05
        %v887 = vrsqrt.pop %v886
        %v888 = vld [vmem:[%s6] sm:$0xff]
        %vm889 = vcmask 64512
        %v891 = vsel %vm889, %v882, 0
        %893 = vmatprep.subr.mxu0 0.0
        %894 = vmatpush1.msra.mxu0 0.0
        %895 = vmatprep.subr.mxu0 0.0
        %896 = vmatpush1.msra.mxu0 0.0
        %897 = vmatprep.subr.mxu0 0.0
        %898 = vmatpush1.msra.mxu0 0.0
        %899 = vmatprep.subr.mxu0 0.0
        %900 = vmatpush1.msra.mxu0 0.0
        %901 = vmatprep.subr.mxu0 0.0
        %902 = vmatpush1.msra.mxu0 0.0
        %903 = vmatprep.subr.mxu0 0.0
        %904 = vmatpush1.msra.mxu0 0.0
        %905 = vmatprep.subr.mxu0 0.0
        %906 = vmatpush1.msra.mxu0 0.0
        %907 = vmatprep.subr.mxu0 0.0
        %908 = vmatpush1.msra.mxu0 0.0
        %909 = vmatprep.subr.mxu0 0.0
        %910 = vmatpush1.msra.mxu0 0.0
        %911 = vmatprep.subr.mxu0 0.0
        %912 = vmatpush1.msra.mxu0 0.0
        %913 = vmatprep.subr.mxu0 0.0
        %914 = vmatpush1.msra.mxu0 0.0
        %915 = vmatprep.subr.mxu0 0.0
        %916 = vmatpush1.msra.mxu0 0.0
        %917 = vmatprep.subr.mxu0 0.0
        %918 = vmatpush1.msra.mxu0 0.0
        %919 = vmatprep.subr.mxu0 0.0
        %920 = vmatpush1.msra.mxu0 0.0
        %921 = vmatprep.subr.mxu0 0.0
        %922 = vmatpush1.msra.mxu0 0.0
        %923 = vmatprep.subr.mxu0 0.0
        %924 = vmatpush1.msra.mxu0 %v888
        %925 = vmatprep.subr.mxu0 0.0
        %926 = vmatpush2.msra.mxu0 0.0
        %927 = vmatprep.subr.mxu0 0.0
        %928 = vmatpush2.msra.mxu0 0.0
        %929 = vmatprep.subr.mxu0 0.0
        %930 = vmatpush2.msra.mxu0 0.0
        %931 = vmatprep.subr.mxu0 0.0
        %932 = vmatpush2.msra.mxu0 0.0
        %933 = vmatprep.subr.mxu0 0.0
        %934 = vmatpush2.msra.mxu0 0.0
        %935 = vmatprep.subr.mxu0 0.0
        %936 = vmatpush2.msra.mxu0 0.0
        %937 = vmatprep.subr.mxu0 0.0
        %938 = vmatpush2.msra.mxu0 0.0
        %939 = vmatprep.subr.mxu0 0.0
        %940 = vmatpush2.msra.mxu0 0.0
        %941 = vmatprep.subr.mxu0 0.0
        %942 = vmatpush2.msra.mxu0 0.0
        %943 = vmatprep.subr.mxu0 0.0
        %944 = vmatpush2.msra.mxu0 0.0
        %945 = vmatprep.subr.mxu0 0.0
        %946 = vmatpush2.msra.mxu0 0.0
        %947 = vmatprep.subr.mxu0 0.0
        %948 = vmatpush2.msra.mxu0 0.0
        %949 = vmatprep.subr.mxu0 0.0
        %950 = vmatpush2.msra.mxu0 0.0
        %951 = vmatprep.subr.mxu0 0.0
        %952 = vmatpush2.msra.mxu0 0.0
        %953 = vmatprep.subr.mxu0 0.0
        %954 = vmatpush2.msra.mxu0 0.0
        %955 = vmatprep.subr.mxu0 0.0
        %956 = vmatpush2.msra.mxu0 0.0
        %957 = vmatprep.mubr.f32.mxu0 0.0
        %958 = vmatmul.mubr.f32.gmra.mxu0 %v891
        %v959 = vpop.f32.mrf.mxu0
        %v960 = vadd.f32 0.0, %v959
        %v961 = vpop.f32.mrf.mxu0
        %962 = vdwg.mxu0
        %v964 = vsel %vm889, %v887, 0
        %966 = vmatprep.subr.mxu0 0.0
        %967 = vmatpush1.msra.mxu0 0.0
        %968 = vmatprep.subr.mxu0 0.0
        %969 = vmatpush1.msra.mxu0 0.0
        %970 = vmatprep.subr.mxu0 0.0
        %971 = vmatpush1.msra.mxu0 0.0
        %972 = vmatprep.subr.mxu0 0.0
        %973 = vmatpush1.msra.mxu0 0.0
        %974 = vmatprep.subr.mxu0 0.0
        %975 = vmatpush1.msra.mxu0 0.0
        %976 = vmatprep.subr.mxu0 0.0
        %977 = vmatpush1.msra.mxu0 0.0
        %978 = vmatprep.subr.mxu0 0.0
        %979 = vmatpush1.msra.mxu0 0.0
        %980 = vmatprep.subr.mxu0 0.0
        %981 = vmatpush1.msra.mxu0 0.0
        %982 = vmatprep.subr.mxu0 0.0
        %983 = vmatpush1.msra.mxu0 0.0
        %984 = vmatprep.subr.mxu0 0.0
        %985 = vmatpush1.msra.mxu0 0.0
        %986 = vmatprep.subr.mxu0 0.0
        %987 = vmatpush1.msra.mxu0 0.0
        %988 = vmatprep.subr.mxu0 0.0
        %989 = vmatpush1.msra.mxu0 0.0
        %990 = vmatprep.subr.mxu0 0.0
        %991 = vmatpush1.msra.mxu0 0.0
        %992 = vmatprep.subr.mxu0 0.0
        %993 = vmatpush1.msra.mxu0 0.0
        %994 = vmatprep.subr.mxu0 0.0
        %995 = vmatpush1.msra.mxu0 0.0
        %996 = vmatprep.subr.mxu0 0.0
        %997 = vmatpush1.msra.mxu0 %v888
        %998 = vmatprep.subr.mxu0 0.0
        %999 = vmatpush2.msra.mxu0 0.0
        %1000 = vmatprep.subr.mxu0 0.0
        %1001 = vmatpush2.msra.mxu0 0.0
        %1002 = vmatprep.subr.mxu0 0.0
        %1003 = vmatpush2.msra.mxu0 0.0
        %1004 = vmatprep.subr.mxu0 0.0
        %1005 = vmatpush2.msra.mxu0 0.0
        %1006 = vmatprep.subr.mxu0 0.0
        %1007 = vmatpush2.msra.mxu0 0.0
        %1008 = vmatprep.subr.mxu0 0.0
        %1009 = vmatpush2.msra.mxu0 0.0
        %1010 = vmatprep.subr.mxu0 0.0
        %1011 = vmatpush2.msra.mxu0 0.0
        %1012 = vmatprep.subr.mxu0 0.0
        %1013 = vmatpush2.msra.mxu0 0.0
        %1014 = vmatprep.subr.mxu0 0.0
        %1015 = vmatpush2.msra.mxu0 0.0
        %1016 = vmatprep.subr.mxu0 0.0
        %1017 = vmatpush2.msra.mxu0 0.0
        %1018 = vmatprep.subr.mxu0 0.0
        %1019 = vmatpush2.msra.mxu0 0.0
        %1020 = vmatprep.subr.mxu0 0.0
        %1021 = vmatpush2.msra.mxu0 0.0
        %1022 = vmatprep.subr.mxu0 0.0
        %1023 = vmatpush2.msra.mxu0 0.0
        %1024 = vmatprep.subr.mxu0 0.0
        %1025 = vmatpush2.msra.mxu0 0.0
        %1026 = vmatprep.subr.mxu0 0.0
        %1027 = vmatpush2.msra.mxu0 0.0
        %1028 = vmatprep.subr.mxu0 0.0
        %1029 = vmatpush2.msra.mxu0 0.0
        %1030 = vmatprep.mubr.f32.mxu0 0.0
        %1031 = vmatmul.mubr.f32.gmra.mxu0 %v964
        %v1032 = vpop.f32.mrf.mxu0
        %v1033 = vadd.f32 0.0, %v1032
        %v1034 = vpop.f32.mrf.mxu0
        %1035 = vdwg.mxu0
        %v1036 = vlaneseq
        %v1037 = vshrl.u32 %v1036, 7
        %v1038 = vsub.s32 0, %v1037
        %v1039 = vrot.slane %v960, %v1038
        %v1040 = vsub.f32 %v708, %v1039
        %v1041 = vsub.f32 %v709, %v1039
        %v1042 = vlaneseq
        %v1043 = vshrl.u32 %v1042, 7
        %v1044 = vsub.s32 0, %v1043
        %v1045 = vrot.slane %v1033, %v1044
        %v1046 = vmul.f32 %v1040, %v1045
        %v1047 = vmul.f32 %v1041, %v1045
        %v1048 = vmax.f32 %v1046, 0.0
        %v1049 = vmax.f32 %v1047, 0.0
        %1050 = vst [vmem:[#allocation3] sm:$0xff] 0.0
        %1051 = vst [vmem:[#allocation3 + $0x8] sm:$0xff] 0.0
        %1052 = vst [vmem:[#allocation3 + $0x10] sm:$0xff] 0.0
        %1053 = vst [vmem:[#allocation3 + $0x18] sm:$0xff] 0.0
        %1054 = vst [vmem:[#allocation3 + $0x20] sm:$0xff] 0.0
        %1055 = vst [vmem:[#allocation3 + $0x28] sm:$0xff] 0.0
        %1056 = vst [vmem:[#allocation3 + $0x30] sm:$0xff] 0.0
        %1057 = vst [vmem:[#allocation3 + $0x38] sm:$0xff] 0.0
        %1058 = vst [vmem:[#allocation3 + $0x40] sm:$0xff] 0.0
        %1059 = vst [vmem:[#allocation3 + $0x48] sm:$0xff] 0.0
        %1060 = vst [vmem:[#allocation3 + $0x50] sm:$0xff] 0.0
        %1061 = vst [vmem:[#allocation3 + $0x58] sm:$0xff] 0.0
        %1062 = vst [vmem:[#allocation3 + $0x20] sm:$0xff] %v1048
        %1063 = vst [vmem:[#allocation3 + $0x38] sm:$0xff] %v1049
        %v1064 = vld [vmem:[#allocation3] sm:$0x80]
        %v1065 = vld [vmem:[#allocation3 + $0x8] sm:$0x80]
        %v1066 = vld [vmem:[#allocation3 + $0x10] sm:$0x80]
        %v1067 = vld [vmem:[#allocation3 + $0x18] sm:$0xff]
        %v1068 = vld [vmem:[#allocation3 + $0x20] sm:$0xff]
        %v1069 = vld [vmem:[#allocation3 + $0x28] sm:$0xff]
        %v1070 = vld [vmem:[#allocation3 + $0x30] sm:$0x7f]
        %v1071 = vld [vmem:[#allocation3 + $0x38] sm:$0x7f]
        %v1072 = vld [vmem:[#allocation3 + $0x40] sm:$0x7f]
        %v1073 = vld [vmem:[#allocation7] sm:$0xff]
        %v1074 = vld [vmem:[#allocation7 + $0x8] sm:$0xff]
        %v1075 = vld [vmem:[#allocation7 + $0x10] sm:$0xff]
        %v1076 = vld [vmem:[#allocation7 + $0x18] sm:$0xff]
        %v1077 = vld [vmem:[#allocation7 + $0x20] sm:$0xff]
        %v1078 = vld [vmem:[#allocation7 + $0x28] sm:$0xff]
        %v1079 = vld [vmem:[#allocation7 + $0x30] sm:$0xff]
        %v1080 = vld [vmem:[#allocation7 + $0x38] sm:$0xff]
        %v1081 = vld [vmem:[#allocation7 + $0x40] sm:$0xff]
        %v1082 = vld [vmem:[#allocation7 + $0x48] sm:$0xff]
        %v1083 = vld [vmem:[#allocation7 + $0x50] sm:$0xff]
        %v1084 = vld [vmem:[#allocation7 + $0x58] sm:$0xff]
        %v1085 = vld [vmem:[#allocation7 + $0x60] sm:$0xff]
        %v1086 = vld [vmem:[#allocation7 + $0x68] sm:$0xff]
        %v1087 = vld [vmem:[#allocation7 + $0x70] sm:$0xff]
        %v1088 = vld [vmem:[#allocation7 + $0x78] sm:$0xff]
        %v1089 = vld [vmem:[#allocation7 + $0x80] sm:$0xff]
        %v1090 = vld [vmem:[#allocation7 + $0x88] sm:$0xff]
        %v1091 = vld [vmem:[#allocation3 + $0x30] sm:$0xff]
        %v1092 = vld [vmem:[#allocation3 + $0x38] sm:$0xff]
        %v1093 = vld [vmem:[#allocation3 + $0x40] sm:$0xff]
        %s1094 = scalar_lea.vmem [#allocation7], 144
        %v1095 = vld [vmem:[%s1094] sm:$0xff]
        %v1096 = vld [vmem:[%s1094 + $0x8] sm:$0xff]
        %v1097 = vld [vmem:[%s1094 + $0x10] sm:$0xff]
        %v1098 = vld [vmem:[%s1094 + $0x18] sm:$0xff]
        %v1099 = vld [vmem:[%s1094 + $0x20] sm:$0xff]
        %v1100 = vld [vmem:[%s1094 + $0x28] sm:$0xff]
        %v1101 = vld [vmem:[%s1094 + $0x30] sm:$0xff]
        %v1102 = vld [vmem:[%s1094 + $0x38] sm:$0xff]
        %v1103 = vld [vmem:[%s1094 + $0x40] sm:$0xff]
        %v1104 = vld [vmem:[%s1094 + $0x48] sm:$0xff]
        %v1105 = vld [vmem:[%s1094 + $0x50] sm:$0xff]
        %v1106 = vld [vmem:[%s1094 + $0x58] sm:$0xff]
        %v1107 = vld [vmem:[%s1094 + $0x60] sm:$0xff]
        %v1108 = vld [vmem:[%s1094 + $0x68] sm:$0xff]
        %v1109 = vld [vmem:[%s1094 + $0x70] sm:$0xff]
        %v1110 = vld [vmem:[%s1094 + $0x78] sm:$0xff]
        %v1111 = vld [vmem:[%s1094 + $0x80] sm:$0xff]
        %v1112 = vld [vmem:[%s1094 + $0x88] sm:$0xff]
        %1119 = vrot.lane.b32.xlu0 %v1067, 8
        %v1120 = vpop.permute.xlu0 %1119
        %1121 = vrot.lane.b32.xlu0 %v1068, 8
        %v1122 = vpop.permute.xlu0 %1121
        %1123 = vrot.lane.b32.xlu0 %v1069, 8
        %v1124 = vpop.permute.xlu0 %1123
        %1125 = vrot.lane.b32.xlu0 %v1091, 8
        %v1126 = vpop.permute.xlu0 %1125
        %1127 = vrot.lane.b32.xlu0 %v1092, 8
        %v1128 = vpop.permute.xlu0 %1127
        %1129 = vrot.lane.b32.xlu0 %v1093, 8
        %v1130 = vpop.permute.xlu0 %1129
        %v1131 = vsel %vm889, %v1120, %v1122
        %v1132 = vsel %vm889, %v1122, %v1124
        %v1133 = vsel %vm889, %v1126, %v1128
        %v1134 = vsel %vm889, %v1128, %v1130
        %vm1137 = vcmask 130048
        %v1138 = vsel %vm1137, %v1132, 0
        %v1140 = vsel %vm1137, %v1134, 0
        %1142 = vmatprep.subr.mxu0 0.0
        %1143 = vmatpush1.msra.mxu0 %v1110
        %1144 = vmatprep.subr.mxu0 0.0
        %1145 = vmatpush1.msra.mxu0 %v1109
        %1146 = vmatprep.subr.mxu0 0.0
        %1147 = vmatpush1.msra.mxu0 %v1108
        %1148 = vmatprep.subr.mxu0 0.0
        %1149 = vmatpush1.msra.mxu0 %v1107
        %1150 = vmatprep.subr.mxu0 0.0
        %1151 = vmatpush1.msra.mxu0 %v1106
        %1152 = vmatprep.subr.mxu0 0.0
        %1153 = vmatpush1.msra.mxu0 %v1105
        %1154 = vmatprep.subr.mxu0 0.0
        %1155 = vmatpush1.msra.mxu0 %v1104
        %1156 = vmatprep.subr.mxu0 0.0
        %1157 = vmatpush1.msra.mxu0 %v1103
        %1158 = vmatprep.subr.mxu0 0.0
        %1159 = vmatpush1.msra.mxu0 %v1102
        %1160 = vmatprep.subr.mxu0 0.0
        %1161 = vmatpush1.msra.mxu0 %v1101
        %1162 = vmatprep.subr.mxu0 0.0
        %1163 = vmatpush1.msra.mxu0 %v1100
        %1164 = vmatprep.subr.mxu0 0.0
        %1165 = vmatpush1.msra.mxu0 %v1099
        %1166 = vmatprep.subr.mxu0 0.0
        %1167 = vmatpush1.msra.mxu0 %v1098
        %1168 = vmatprep.subr.mxu0 0.0
        %1169 = vmatpush1.msra.mxu0 %v1097
        %1170 = vmatprep.subr.mxu0 0.0
        %1171 = vmatpush1.msra.mxu0 %v1096
        %1172 = vmatprep.subr.mxu0 0.0
        %1173 = vmatpush1.msra.mxu0 %v1095
        %1174 = vmatprep.subr.mxu0 0.0
        %1175 = vmatpush2.msra.mxu0 0.0
        %1176 = vmatprep.subr.mxu0 0.0
        %1177 = vmatpush2.msra.mxu0 0.0
        %1178 = vmatprep.subr.mxu0 0.0
        %1179 = vmatpush2.msra.mxu0 0.0
        %1180 = vmatprep.subr.mxu0 0.0
        %1181 = vmatpush2.msra.mxu0 0.0
        %1182 = vmatprep.subr.mxu0 0.0
        %1183 = vmatpush2.msra.mxu0 0.0
        %1184 = vmatprep.subr.mxu0 0.0
        %1185 = vmatpush2.msra.mxu0 0.0
        %1186 = vmatprep.subr.mxu0 0.0
        %1187 = vmatpush2.msra.mxu0 0.0
        %1188 = vmatprep.subr.mxu0 0.0
        %1189 = vmatpush2.msra.mxu0 0.0
        %1190 = vmatprep.subr.mxu0 0.0
        %1191 = vmatpush2.msra.mxu0 0.0
        %1192 = vmatprep.subr.mxu0 0.0
        %1193 = vmatpush2.msra.mxu0 0.0
        %1194 = vmatprep.subr.mxu0 0.0
        %1195 = vmatpush2.msra.mxu0 0.0
        %1196 = vmatprep.subr.mxu0 0.0
        %1197 = vmatpush2.msra.mxu0 0.0
        %1198 = vmatprep.subr.mxu0 0.0
        %1199 = vmatpush2.msra.mxu0 0.0
        %1200 = vmatprep.subr.mxu0 0.0
        %1201 = vmatpush2.msra.mxu0 0.0
        %1202 = vmatprep.subr.mxu0 0.0
        %1203 = vmatpush2.msra.mxu0 %v1112
        %1204 = vmatprep.subr.mxu0 0.0
        %1205 = vmatpush2.msra.mxu0 %v1111
        %1206 = vmatprep.mubr.f32.mxu0 %v1138
        %1207 = vmatmul.mubr.f32.gmra.mxu0 %v1131
        %v1208 = vpop.f32.mrf.mxu0
        %v1209 = vadd.f32 0.0, %v1208
        %v1210 = vpop.f32.mrf.mxu0
        %1211 = vmatprep.mubr.f32.mxu0 %v1140
        %1212 = vmatmul.mubr.f32.gmra.mxu0 %v1133
        %v1213 = vpop.f32.mrf.mxu0
        %v1214 = vadd.f32 0.0, %v1213
        %v1215 = vpop.f32.mrf.mxu0
        %1216 = vdwg.mxu0
        %v1223 = vrot.slane %v1064, 7
        %v1224 = vrot.slane %v1067, 7
        %v1225 = vsel %vm477, %v1223, %v1224
        %v1226 = vrot.slane %v1065, 7
        %v1227 = vrot.slane %v1068, 7
        %v1228 = vsel %vm477, %v1226, %v1227
        %v1229 = vrot.slane %v1066, 7
        %v1230 = vrot.slane %v1069, 7
        %v1231 = vsel %vm477, %v1229, %v1230
        %v1232 = vrot.slane %v1070, 7
        %v1233 = vsel %vm477, %v1224, %v1232
        %v1234 = vrot.slane %v1071, 7
        %v1235 = vsel %vm477, %v1227, %v1234
        %v1236 = vrot.slane %v1072, 7
        %v1237 = vsel %vm477, %v1230, %v1236
        %1238 = vrot.lane.b32.xlu0 %v1225, 8
        %v1239 = vpop.permute.xlu0 %1238
        %1240 = vrot.lane.b32.xlu0 %v1228, 8
        %v1241 = vpop.permute.xlu0 %1240
        %1242 = vrot.lane.b32.xlu0 %v1231, 8
        %v1243 = vpop.permute.xlu0 %1242
        %1244 = vrot.lane.b32.xlu0 %v1233, 8
        %v1245 = vpop.permute.xlu0 %1244
        %1246 = vrot.lane.b32.xlu0 %v1235, 8
        %v1247 = vpop.permute.xlu0 %1246
        %1248 = vrot.lane.b32.xlu0 %v1237, 8
        %v1249 = vpop.permute.xlu0 %1248
        %v1250 = vsel %vm889, %v1239, %v1241
        %v1251 = vsel %vm889, %v1241, %v1243
        %v1252 = vsel %vm889, %v1245, %v1247
        %v1253 = vsel %vm889, %v1247, %v1249
        %v1256 = vsel %vm1137, %v1251, 0
        %v1258 = vsel %vm1137, %v1253, 0
        %1260 = vmatprep.subr.mxu0 0.0
        %1261 = vmatpush1.msra.mxu0 %v1088
        %1262 = vmatprep.subr.mxu0 0.0
        %1263 = vmatpush1.msra.mxu0 %v1087
        %1264 = vmatprep.subr.mxu0 0.0
        %1265 = vmatpush1.msra.mxu0 %v1086
        %1266 = vmatprep.subr.mxu0 0.0
        %1267 = vmatpush1.msra.mxu0 %v1085
        %1268 = vmatprep.subr.mxu0 0.0
        %1269 = vmatpush1.msra.mxu0 %v1084
        %1270 = vmatprep.subr.mxu0 0.0
        %1271 = vmatpush1.msra.mxu0 %v1083
        %1272 = vmatprep.subr.mxu0 0.0
        %1273 = vmatpush1.msra.mxu0 %v1082
        %1274 = vmatprep.subr.mxu0 0.0
        %1275 = vmatpush1.msra.mxu0 %v1081
        %1276 = vmatprep.subr.mxu0 0.0
        %1277 = vmatpush1.msra.mxu0 %v1080
        %1278 = vmatprep.subr.mxu0 0.0
        %1279 = vmatpush1.msra.mxu0 %v1079
        %1280 = vmatprep.subr.mxu0 0.0
        %1281 = vmatpush1.msra.mxu0 %v1078
        %1282 = vmatprep.subr.mxu0 0.0
        %1283 = vmatpush1.msra.mxu0 %v1077
        %1284 = vmatprep.subr.mxu0 0.0
        %1285 = vmatpush1.msra.mxu0 %v1076
        %1286 = vmatprep.subr.mxu0 0.0
        %1287 = vmatpush1.msra.mxu0 %v1075
        %1288 = vmatprep.subr.mxu0 0.0
        %1289 = vmatpush1.msra.mxu0 %v1074
        %1290 = vmatprep.subr.mxu0 0.0
        %1291 = vmatpush1.msra.mxu0 %v1073
        %1292 = vmatprep.subr.mxu0 0.0
        %1293 = vmatpush2.msra.mxu0 0.0
        %1294 = vmatprep.subr.mxu0 0.0
        %1295 = vmatpush2.msra.mxu0 0.0
        %1296 = vmatprep.subr.mxu0 0.0
        %1297 = vmatpush2.msra.mxu0 0.0
        %1298 = vmatprep.subr.mxu0 0.0
        %1299 = vmatpush2.msra.mxu0 0.0
        %1300 = vmatprep.subr.mxu0 0.0
        %1301 = vmatpush2.msra.mxu0 0.0
        %1302 = vmatprep.subr.mxu0 0.0
        %1303 = vmatpush2.msra.mxu0 0.0
        %1304 = vmatprep.subr.mxu0 0.0
        %1305 = vmatpush2.msra.mxu0 0.0
        %1306 = vmatprep.subr.mxu0 0.0
        %1307 = vmatpush2.msra.mxu0 0.0
        %1308 = vmatprep.subr.mxu0 0.0
        %1309 = vmatpush2.msra.mxu0 0.0
        %1310 = vmatprep.subr.mxu0 0.0
        %1311 = vmatpush2.msra.mxu0 0.0
        %1312 = vmatprep.subr.mxu0 0.0
        %1313 = vmatpush2.msra.mxu0 0.0
        %1314 = vmatprep.subr.mxu0 0.0
        %1315 = vmatpush2.msra.mxu0 0.0
        %1316 = vmatprep.subr.mxu0 0.0
        %1317 = vmatpush2.msra.mxu0 0.0
        %1318 = vmatprep.subr.mxu0 0.0
        %1319 = vmatpush2.msra.mxu0 0.0
        %1320 = vmatprep.subr.mxu0 0.0
        %1321 = vmatpush2.msra.mxu0 %v1090
        %1322 = vmatprep.subr.mxu0 0.0
        %1323 = vmatpush2.msra.mxu0 %v1089
        %1324 = vmatprep.mubr.f32.mxu0 %v1256
        %1325 = vmatmul.mubr.f32.gmra.mxu0 %v1250
        %v1326 = vpop.f32.mrf.mxu0
        %v1327 = vadd.f32 %v1209, %v1326
        %v1328 = vpop.f32.mrf.mxu0
        %1329 = vmatprep.mubr.f32.mxu0 %v1258
        %1330 = vmatmul.mubr.f32.gmra.mxu0 %v1252
        %v1331 = vpop.f32.mrf.mxu0
        %v1332 = vadd.f32 %v1214, %v1331
        %v1333 = vpop.f32.mrf.mxu0
        %1334 = vdwg.mxu0
        %v1335 = vld [vmem:[#allocation3 + $0x18] sm:$0xfe]
        %v1336 = vld [vmem:[#allocation3 + $0x20] sm:$0xfe]
        %v1337 = vld [vmem:[#allocation3 + $0x28] sm:$0xfe]
        %v1338 = vld [vmem:[#allocation3 + $0x30] sm:$0xff]
        %v1339 = vld [vmem:[#allocation3 + $0x38] sm:$0xff]
        %v1340 = vld [vmem:[#allocation3 + $0x40] sm:$0xff]
        %v1341 = vld [vmem:[#allocation3 + $0x48] sm:$0x1]
        %v1342 = vld [vmem:[#allocation3 + $0x50] sm:$0x1]
        %v1343 = vld [vmem:[#allocation3 + $0x58] sm:$0x1]
        %s1344 = scalar_lea.vmem [#allocation7], 288
        %v1345 = vld [vmem:[%s1344] sm:$0xff]
        %v1346 = vld [vmem:[%s1344 + $0x8] sm:$0xff]
        %v1347 = vld [vmem:[%s1344 + $0x10] sm:$0xff]
        %v1348 = vld [vmem:[%s1344 + $0x18] sm:$0xff]
        %v1349 = vld [vmem:[%s1344 + $0x20] sm:$0xff]
        %v1350 = vld [vmem:[%s1344 + $0x28] sm:$0xff]
        %v1351 = vld [vmem:[%s1344 + $0x30] sm:$0xff]
        %v1352 = vld [vmem:[%s1344 + $0x38] sm:$0xff]
        %v1353 = vld [vmem:[%s1344 + $0x40] sm:$0xff]
        %v1354 = vld [vmem:[%s1344 + $0x48] sm:$0xff]
        %v1355 = vld [vmem:[%s1344 + $0x50] sm:$0xff]
        %v1356 = vld [vmem:[%s1344 + $0x58] sm:$0xff]
        %v1357 = vld [vmem:[%s1344 + $0x60] sm:$0xff]
        %v1358 = vld [vmem:[%s1344 + $0x68] sm:$0xff]
        %v1359 = vld [vmem:[%s1344 + $0x70] sm:$0xff]
        %v1360 = vld [vmem:[%s1344 + $0x78] sm:$0xff]
        %v1361 = vld [vmem:[%s1344 + $0x80] sm:$0xff]
        %v1362 = vld [vmem:[%s1344 + $0x88] sm:$0xff]
        %v1372 = vrot.slane %v1335, 1
        %v1373 = vrot.slane %v1338, 1
        %v1374 = vsel %vm599, %v1372, %v1373
        %v1375 = vrot.slane %v1336, 1
        %v1376 = vrot.slane %v1339, 1
        %v1377 = vsel %vm599, %v1375, %v1376
        %v1378 = vrot.slane %v1337, 1
        %v1379 = vrot.slane %v1340, 1
        %v1380 = vsel %vm599, %v1378, %v1379
        %v1381 = vrot.slane %v1341, 1
        %v1382 = vsel %vm599, %v1373, %v1381
        %v1383 = vrot.slane %v1342, 1
        %v1384 = vsel %vm599, %v1376, %v1383
        %v1385 = vrot.slane %v1343, 1
        %v1386 = vsel %vm599, %v1379, %v1385
        %1387 = vrot.lane.b32.xlu0 %v1374, 8
        %v1388 = vpop.permute.xlu0 %1387
        %1389 = vrot.lane.b32.xlu0 %v1377, 8
        %v1390 = vpop.permute.xlu0 %1389
        %1391 = vrot.lane.b32.xlu0 %v1380, 8
        %v1392 = vpop.permute.xlu0 %1391
        %1393 = vrot.lane.b32.xlu0 %v1382, 8
        %v1394 = vpop.permute.xlu0 %1393
        %1395 = vrot.lane.b32.xlu0 %v1384, 8
        %v1396 = vpop.permute.xlu0 %1395
        %1397 = vrot.lane.b32.xlu0 %v1386, 8
        %v1398 = vpop.permute.xlu0 %1397
        %v1399 = vsel %vm889, %v1388, %v1390
        %v1400 = vsel %vm889, %v1390, %v1392
        %v1401 = vsel %vm889, %v1394, %v1396
        %v1402 = vsel %vm889, %v1396, %v1398
        %v1405 = vsel %vm1137, %v1400, 0
        %v1407 = vsel %vm1137, %v1402, 0
        %1409 = vmatprep.subr.mxu0 0.0
        %1410 = vmatpush1.msra.mxu0 %v1360
        %1411 = vmatprep.subr.mxu0 0.0
        %1412 = vmatpush1.msra.mxu0 %v1359
        %1413 = vmatprep.subr.mxu0 0.0
        %1414 = vmatpush1.msra.mxu0 %v1358
        %1415 = vmatprep.subr.mxu0 0.0
        %1416 = vmatpush1.msra.mxu0 %v1357
        %1417 = vmatprep.subr.mxu0 0.0
        %1418 = vmatpush1.msra.mxu0 %v1356
        %1419 = vmatprep.subr.mxu0 0.0
        %1420 = vmatpush1.msra.mxu0 %v1355
        %1421 = vmatprep.subr.mxu0 0.0
        %1422 = vmatpush1.msra.mxu0 %v1354
        %1423 = vmatprep.subr.mxu0 0.0
        %1424 = vmatpush1.msra.mxu0 %v1353
        %1425 = vmatprep.subr.mxu0 0.0
        %1426 = vmatpush1.msra.mxu0 %v1352
        %1427 = vmatprep.subr.mxu0 0.0
        %1428 = vmatpush1.msra.mxu0 %v1351
        %1429 = vmatprep.subr.mxu0 0.0
        %1430 = vmatpush1.msra.mxu0 %v1350
        %1431 = vmatprep.subr.mxu0 0.0
        %1432 = vmatpush1.msra.mxu0 %v1349
        %1433 = vmatprep.subr.mxu0 0.0
        %1434 = vmatpush1.msra.mxu0 %v1348
        %1435 = vmatprep.subr.mxu0 0.0
        %1436 = vmatpush1.msra.mxu0 %v1347
        %1437 = vmatprep.subr.mxu0 0.0
        %1438 = vmatpush1.msra.mxu0 %v1346
        %1439 = vmatprep.subr.mxu0 0.0
        %1440 = vmatpush1.msra.mxu0 %v1345
        %1441 = vmatprep.subr.mxu0 0.0
        %1442 = vmatpush2.msra.mxu0 0.0
        %1443 = vmatprep.subr.mxu0 0.0
        %1444 = vmatpush2.msra.mxu0 0.0
        %1445 = vmatprep.subr.mxu0 0.0
        %1446 = vmatpush2.msra.mxu0 0.0
        %1447 = vmatprep.subr.mxu0 0.0
        %1448 = vmatpush2.msra.mxu0 0.0
        %1449 = vmatprep.subr.mxu0 0.0
        %1450 = vmatpush2.msra.mxu0 0.0
        %1451 = vmatprep.subr.mxu0 0.0
        %1452 = vmatpush2.msra.mxu0 0.0
        %1453 = vmatprep.subr.mxu0 0.0
        %1454 = vmatpush2.msra.mxu0 0.0
        %1455 = vmatprep.subr.mxu0 0.0
        %1456 = vmatpush2.msra.mxu0 0.0
        %1457 = vmatprep.subr.mxu0 0.0
        %1458 = vmatpush2.msra.mxu0 0.0
        %1459 = vmatprep.subr.mxu0 0.0
        %1460 = vmatpush2.msra.mxu0 0.0
        %1461 = vmatprep.subr.mxu0 0.0
        %1462 = vmatpush2.msra.mxu0 0.0
        %1463 = vmatprep.subr.mxu0 0.0
        %1464 = vmatpush2.msra.mxu0 0.0
        %1465 = vmatprep.subr.mxu0 0.0
        %1466 = vmatpush2.msra.mxu0 0.0
        %1467 = vmatprep.subr.mxu0 0.0
        %1468 = vmatpush2.msra.mxu0 0.0
        %1469 = vmatprep.subr.mxu0 0.0
        %1470 = vmatpush2.msra.mxu0 %v1362
        %1471 = vmatprep.subr.mxu0 0.0
        %1472 = vmatpush2.msra.mxu0 %v1361
        %1473 = vmatprep.mubr.f32.mxu0 %v1405
        %1474 = vmatmul.mubr.f32.gmra.mxu0 %v1399
        %v1475 = vpop.f32.mrf.mxu0
        %v1476 = vadd.f32 0.0, %v1475
        %v1477 = vpop.f32.mrf.mxu0
        %1478 = vmatprep.mubr.f32.mxu0 %v1407
        %1479 = vmatmul.mubr.f32.gmra.mxu0 %v1401
        %v1480 = vpop.f32.mrf.mxu0
        %v1481 = vadd.f32 0.0, %v1480
        %v1482 = vpop.f32.mrf.mxu0
        %1483 = vdwg.mxu0
        %v1484 = vadd.f32 %v1327, %v1476
        %v1485 = vadd.f32 %v1332, %v1481
        %v1486 = vld [vmem:[%s4] sm:$0x1]
        %v1488 = vlaneseq
        %v1489 = vshrl.u32 %v1488, 7
        %v1490 = vsub.s32 0, %v1489
        %v1491 = vrot.slane %v1486, %v1490
        %v1493 = vadd.f32 %v1484, %v1491
        %v1494 = vadd.f32 %v1485, %v1491
        %v1495 = vadd.f32 %v1493, %v1494
        %v1496 = vrot.slane %v1495, 4
        %v1497 = vadd.f32 %v1495, %v1496
        %v1498 = vrot.slane %v1497, 2
        %v1499 = vadd.f32 %v1497, %v1498
        %v1500 = vrot.slane %v1499, 1
        %v1501 = vadd.f32 %v1499, %v1500
        %v1502 = vmul.f32 %v1493, %v1493
        %v1503 = vmul.f32 %v1494, %v1494
        %v1504 = vadd.f32 %v1502, %v1503
        %v1505 = vrot.slane %v1504, 4
        %v1506 = vadd.f32 %v1504, %v1505
        %v1507 = vrot.slane %v1506, 2
        %v1508 = vadd.f32 %v1506, %v1507
        %v1509 = vrot.slane %v1508, 1
        %v1510 = vadd.f32 %v1508, %v1509
        %v1511 = vld [vmem:[%s5] sm:$0xff]
        %v1512 = vld [vmem:[%s5 + $0x8] sm:$0xff]
        %v1513 = vld [vmem:[%s5 + $0x10] sm:$0xff]
        %v1514 = vld [vmem:[%s5 + $0x18] sm:$0xff]
        %v1515 = vld [vmem:[%s5 + $0x20] sm:$0xff]
        %v1516 = vld [vmem:[%s5 + $0x28] sm:$0xff]
        %v1517 = vld [vmem:[%s5 + $0x30] sm:$0xff]
        %v1518 = vld [vmem:[%s5 + $0x38] sm:$0xff]
        %v1519 = vld [vmem:[%s5 + $0x40] sm:$0xff]
        %v1520 = vld [vmem:[%s5 + $0x48] sm:$0xff]
        %v1521 = vld [vmem:[%s5 + $0x50] sm:$0xff]
        %v1522 = vld [vmem:[%s5 + $0x58] sm:$0xff]
        %v1523 = vld [vmem:[%s5 + $0x60] sm:$0xff]
        %v1524 = vld [vmem:[%s5 + $0x68] sm:$0xff]
        %v1525 = vld [vmem:[%s5 + $0x70] sm:$0xff]
        %v1526 = vld [vmem:[%s5 + $0x78] sm:$0xff]
        %1527 = vmatprep.subr.mxu0 0.0
        %1528 = vmatpush1.msra.mxu0 %v1526
        %1529 = vmatprep.subr.mxu0 0.0
        %1530 = vmatpush1.msra.mxu0 %v1525
        %1531 = vmatprep.subr.mxu0 0.0
        %1532 = vmatpush1.msra.mxu0 %v1524
        %1533 = vmatprep.subr.mxu0 0.0
        %1534 = vmatpush1.msra.mxu0 %v1523
        %1535 = vmatprep.subr.mxu0 0.0
        %1536 = vmatpush1.msra.mxu0 %v1522
        %1537 = vmatprep.subr.mxu0 0.0
        %1538 = vmatpush1.msra.mxu0 %v1521
        %1539 = vmatprep.subr.mxu0 0.0
        %1540 = vmatpush1.msra.mxu0 %v1520
        %1541 = vmatprep.subr.mxu0 0.0
        %1542 = vmatpush1.msra.mxu0 %v1519
        %1543 = vmatprep.subr.mxu0 0.0
        %1544 = vmatpush1.msra.mxu0 %v1518
        %1545 = vmatprep.subr.mxu0 0.0
        %1546 = vmatpush1.msra.mxu0 %v1517
        %1547 = vmatprep.subr.mxu0 0.0
        %1548 = vmatpush1.msra.mxu0 %v1516
        %1549 = vmatprep.subr.mxu0 0.0
        %1550 = vmatpush1.msra.mxu0 %v1515
        %1551 = vmatprep.subr.mxu0 0.0
        %1552 = vmatpush1.msra.mxu0 %v1514
        %1553 = vmatprep.subr.mxu0 0.0
        %1554 = vmatpush1.msra.mxu0 %v1513
        %1555 = vmatprep.subr.mxu0 0.0
        %1556 = vmatpush1.msra.mxu0 %v1512
        %1557 = vmatprep.subr.mxu0 0.0
        %1558 = vmatpush1.msra.mxu0 %v1511
        %1559 = vmatprep.subr.mxu0 0.0
        %1560 = vmatpush2.msra.mxu0 0.0
        %1561 = vmatprep.subr.mxu0 0.0
        %1562 = vmatpush2.msra.mxu0 0.0
        %1563 = vmatprep.subr.mxu0 0.0
        %1564 = vmatpush2.msra.mxu0 0.0
        %1565 = vmatprep.subr.mxu0 0.0
        %1566 = vmatpush2.msra.mxu0 0.0
        %1567 = vmatprep.subr.mxu0 0.0
        %1568 = vmatpush2.msra.mxu0 0.0
        %1569 = vmatprep.subr.mxu0 0.0
        %1570 = vmatpush2.msra.mxu0 0.0
        %1571 = vmatprep.subr.mxu0 0.0
        %1572 = vmatpush2.msra.mxu0 0.0
        %1573 = vmatprep.subr.mxu0 0.0
        %1574 = vmatpush2.msra.mxu0 0.0
        %1575 = vmatprep.subr.mxu0 0.0
        %1576 = vmatpush2.msra.mxu0 0.0
        %1577 = vmatprep.subr.mxu0 0.0
        %1578 = vmatpush2.msra.mxu0 0.0
        %1579 = vmatprep.subr.mxu0 0.0
        %1580 = vmatpush2.msra.mxu0 0.0
        %1581 = vmatprep.subr.mxu0 0.0
        %1582 = vmatpush2.msra.mxu0 0.0
        %1583 = vmatprep.subr.mxu0 0.0
        %1584 = vmatpush2.msra.mxu0 0.0
        %1585 = vmatprep.subr.mxu0 0.0
        %1586 = vmatpush2.msra.mxu0 0.0
        %1587 = vmatprep.subr.mxu0 0.0
        %1588 = vmatpush2.msra.mxu0 0.0
        %1589 = vmatprep.subr.mxu0 0.0
        %1590 = vmatpush2.msra.mxu0 0.0
        %1591 = vmatprep.mubr.f32.mxu0 0.0
        %1592 = vmatmul.mubr.f32.gmra.mxu0 %v1501
        %v1593 = vpop.f32.mrf.mxu0
        %v1594 = vadd.f32 0.0, %v1593
        %v1595 = vpop.f32.mrf.mxu0
        %1596 = vdwg.mxu0
        %1597 = vmatprep.subr.mxu0 0.0
        %1598 = vmatpush1.msra.mxu0 %v1526
        %1599 = vmatprep.subr.mxu0 0.0
        %1600 = vmatpush1.msra.mxu0 %v1525
        %1601 = vmatprep.subr.mxu0 0.0
        %1602 = vmatpush1.msra.mxu0 %v1524
        %1603 = vmatprep.subr.mxu0 0.0
        %1604 = vmatpush1.msra.mxu0 %v1523
        %1605 = vmatprep.subr.mxu0 0.0
        %1606 = vmatpush1.msra.mxu0 %v1522
        %1607 = vmatprep.subr.mxu0 0.0
        %1608 = vmatpush1.msra.mxu0 %v1521
        %1609 = vmatprep.subr.mxu0 0.0
        %1610 = vmatpush1.msra.mxu0 %v1520
        %1611 = vmatprep.subr.mxu0 0.0
        %1612 = vmatpush1.msra.mxu0 %v1519
        %1613 = vmatprep.subr.mxu0 0.0
        %1614 = vmatpush1.msra.mxu0 %v1518
        %1615 = vmatprep.subr.mxu0 0.0
        %1616 = vmatpush1.msra.mxu0 %v1517
        %1617 = vmatprep.subr.mxu0 0.0
        %1618 = vmatpush1.msra.mxu0 %v1516
        %1619 = vmatprep.subr.mxu0 0.0
        %1620 = vmatpush1.msra.mxu0 %v1515
        %1621 = vmatprep.subr.mxu0 0.0
        %1622 = vmatpush1.msra.mxu0 %v1514
        %1623 = vmatprep.subr.mxu0 0.0
        %1624 = vmatpush1.msra.mxu0 %v1513
        %1625 = vmatprep.subr.mxu0 0.0
        %1626 = vmatpush1.msra.mxu0 %v1512
        %1627 = vmatprep.subr.mxu0 0.0
        %1628 = vmatpush1.msra.mxu0 %v1511
        %1629 = vmatprep.subr.mxu0 0.0
        %1630 = vmatpush2.msra.mxu0 0.0
        %1631 = vmatprep.subr.mxu0 0.0
        %1632 = vmatpush2.msra.mxu0 0.0
        %1633 = vmatprep.subr.mxu0 0.0
        %1634 = vmatpush2.msra.mxu0 0.0
        %1635 = vmatprep.subr.mxu0 0.0
        %1636 = vmatpush2.msra.mxu0 0.0
        %1637 = vmatprep.subr.mxu0 0.0
        %1638 = vmatpush2.msra.mxu0 0.0
        %1639 = vmatprep.subr.mxu0 0.0
        %1640 = vmatpush2.msra.mxu0 0.0
        %1641 = vmatprep.subr.mxu0 0.0
        %1642 = vmatpush2.msra.mxu0 0.0
        %1643 = vmatprep.subr.mxu0 0.0
        %1644 = vmatpush2.msra.mxu0 0.0
        %1645 = vmatprep.subr.mxu0 0.0
        %1646 = vmatpush2.msra.mxu0 0.0
        %1647 = vmatprep.subr.mxu0 0.0
        %1648 = vmatpush2.msra.mxu0 0.0
        %1649 = vmatprep.subr.mxu0 0.0
        %1650 = vmatpush2.msra.mxu0 0.0
        %1651 = vmatprep.subr.mxu0 0.0
        %1652 = vmatpush2.msra.mxu0 0.0
        %1653 = vmatprep.subr.mxu0 0.0
        %1654 = vmatpush2.msra.mxu0 0.0
        %1655 = vmatprep.subr.mxu0 0.0
        %1656 = vmatpush2.msra.mxu0 0.0
        %1657 = vmatprep.subr.mxu0 0.0
        %1658 = vmatpush2.msra.mxu0 0.0
        %1659 = vmatprep.subr.mxu0 0.0
        %1660 = vmatpush2.msra.mxu0 0.0
        %1661 = vmatprep.mubr.f32.mxu0 0.0
        %1662 = vmatmul.mubr.f32.gmra.mxu0 %v1510
        %v1663 = vpop.f32.mrf.mxu0
        %v1664 = vadd.f32 0.0, %v1663
        %v1665 = vpop.f32.mrf.mxu0
        %1666 = vdwg.mxu0
        %v1667 = vmul.f32 %v1594, 0.00390625
        %v1668 = vmul.f32 %v1664, 0.00390625
        %v1669 = vmul.f32 %v1667, %v1667
        %v1670 = vsub.f32 %v1668, %v1669
        %v1671 = vadd.f32 %v1670, 1e-05
        %v1672 = vrsqrt.pop %v1671
        %v1673 = vld [vmem:[%s6] sm:$0xff]
        %v1675 = vsel %vm889, %v1667, 0
        %1677 = vmatprep.subr.mxu0 0.0
        %1678 = vmatpush1.msra.mxu0 0.0
        %1679 = vmatprep.subr.mxu0 0.0
        %1680 = vmatpush1.msra.mxu0 0.0
        %1681 = vmatprep.subr.mxu0 0.0
        %1682 = vmatpush1.msra.mxu0 0.0
        %1683 = vmatprep.subr.mxu0 0.0
        %1684 = vmatpush1.msra.mxu0 0.0
        %1685 = vmatprep.subr.mxu0 0.0
        %1686 = vmatpush1.msra.mxu0 0.0
        %1687 = vmatprep.subr.mxu0 0.0
        %1688 = vmatpush1.msra.mxu0 0.0
        %1689 = vmatprep.subr.mxu0 0.0
        %1690 = vmatpush1.msra.mxu0 0.0
        %1691 = vmatprep.subr.mxu0 0.0
        %1692 = vmatpush1.msra.mxu0 0.0
        %1693 = vmatprep.subr.mxu0 0.0
        %1694 = vmatpush1.msra.mxu0 0.0
        %1695 = vmatprep.subr.mxu0 0.0
        %1696 = vmatpush1.msra.mxu0 0.0
        %1697 = vmatprep.subr.mxu0 0.0
        %1698 = vmatpush1.msra.mxu0 0.0
        %1699 = vmatprep.subr.mxu0 0.0
        %1700 = vmatpush1.msra.mxu0 0.0
        %1701 = vmatprep.subr.mxu0 0.0
        %1702 = vmatpush1.msra.mxu0 0.0
        %1703 = vmatprep.subr.mxu0 0.0
        %1704 = vmatpush1.msra.mxu0 0.0
        %1705 = vmatprep.subr.mxu0 0.0
        %1706 = vmatpush1.msra.mxu0 0.0
        %1707 = vmatprep.subr.mxu0 0.0
        %1708 = vmatpush1.msra.mxu0 %v1673
        %1709 = vmatprep.subr.mxu0 0.0
        %1710 = vmatpush2.msra.mxu0 0.0
        %1711 = vmatprep.subr.mxu0 0.0
        %1712 = vmatpush2.msra.mxu0 0.0
        %1713 = vmatprep.subr.mxu0 0.0
        %1714 = vmatpush2.msra.mxu0 0.0
        %1715 = vmatprep.subr.mxu0 0.0
        %1716 = vmatpush2.msra.mxu0 0.0
        %1717 = vmatprep.subr.mxu0 0.0
        %1718 = vmatpush2.msra.mxu0 0.0
        %1719 = vmatprep.subr.mxu0 0.0
        %1720 = vmatpush2.msra.mxu0 0.0
        %1721 = vmatprep.subr.mxu0 0.0
        %1722 = vmatpush2.msra.mxu0 0.0
        %1723 = vmatprep.subr.mxu0 0.0
        %1724 = vmatpush2.msra.mxu0 0.0
        %1725 = vmatprep.subr.mxu0 0.0
        %1726 = vmatpush2.msra.mxu0 0.0
        %1727 = vmatprep.subr.mxu0 0.0
        %1728 = vmatpush2.msra.mxu0 0.0
        %1729 = vmatprep.subr.mxu0 0.0
        %1730 = vmatpush2.msra.mxu0 0.0
        %1731 = vmatprep.subr.mxu0 0.0
        %1732 = vmatpush2.msra.mxu0 0.0
        %1733 = vmatprep.subr.mxu0 0.0
        %1734 = vmatpush2.msra.mxu0 0.0
        %1735 = vmatprep.subr.mxu0 0.0
        %1736 = vmatpush2.msra.mxu0 0.0
        %1737 = vmatprep.subr.mxu0 0.0
        %1738 = vmatpush2.msra.mxu0 0.0
        %1739 = vmatprep.subr.mxu0 0.0
        %1740 = vmatpush2.msra.mxu0 0.0
        %1741 = vmatprep.mubr.f32.mxu0 0.0
        %1742 = vmatmul.mubr.f32.gmra.mxu0 %v1675
        %v1743 = vpop.f32.mrf.mxu0
        %v1744 = vadd.f32 0.0, %v1743
        %v1745 = vpop.f32.mrf.mxu0
        %1746 = vdwg.mxu0
        %v1748 = vsel %vm889, %v1672, 0
        %1750 = vmatprep.subr.mxu0 0.0
        %1751 = vmatpush1.msra.mxu0 0.0
        %1752 = vmatprep.subr.mxu0 0.0
        %1753 = vmatpush1.msra.mxu0 0.0
        %1754 = vmatprep.subr.mxu0 0.0
        %1755 = vmatpush1.msra.mxu0 0.0
        %1756 = vmatprep.subr.mxu0 0.0
        %1757 = vmatpush1.msra.mxu0 0.0
        %1758 = vmatprep.subr.mxu0 0.0
        %1759 = vmatpush1.msra.mxu0 0.0
        %1760 = vmatprep.subr.mxu0 0.0
        %1761 = vmatpush1.msra.mxu0 0.0
        %1762 = vmatprep.subr.mxu0 0.0
        %1763 = vmatpush1.msra.mxu0 0.0
        %1764 = vmatprep.subr.mxu0 0.0
        %1765 = vmatpush1.msra.mxu0 0.0
        %1766 = vmatprep.subr.mxu0 0.0
        %1767 = vmatpush1.msra.mxu0 0.0
        %1768 = vmatprep.subr.mxu0 0.0
        %1769 = vmatpush1.msra.mxu0 0.0
        %1770 = vmatprep.subr.mxu0 0.0
        %1771 = vmatpush1.msra.mxu0 0.0
        %1772 = vmatprep.subr.mxu0 0.0
        %1773 = vmatpush1.msra.mxu0 0.0
        %1774 = vmatprep.subr.mxu0 0.0
        %1775 = vmatpush1.msra.mxu0 0.0
        %1776 = vmatprep.subr.mxu0 0.0
        %1777 = vmatpush1.msra.mxu0 0.0
        %1778 = vmatprep.subr.mxu0 0.0
        %1779 = vmatpush1.msra.mxu0 0.0
        %1780 = vmatprep.subr.mxu0 0.0
        %1781 = vmatpush1.msra.mxu0 %v1673
        %1782 = vmatprep.subr.mxu0 0.0
        %1783 = vmatpush2.msra.mxu0 0.0
        %1784 = vmatprep.subr.mxu0 0.0
        %1785 = vmatpush2.msra.mxu0 0.0
        %1786 = vmatprep.subr.mxu0 0.0
        %1787 = vmatpush2.msra.mxu0 0.0
        %1788 = vmatprep.subr.mxu0 0.0
        %1789 = vmatpush2.msra.mxu0 0.0
        %1790 = vmatprep.subr.mxu0 0.0
        %1791 = vmatpush2.msra.mxu0 0.0
        %1792 = vmatprep.subr.mxu0 0.0
        %1793 = vmatpush2.msra.mxu0 0.0
        %1794 = vmatprep.subr.mxu0 0.0
        %1795 = vmatpush2.msra.mxu0 0.0
        %1796 = vmatprep.subr.mxu0 0.0
        %1797 = vmatpush2.msra.mxu0 0.0
        %1798 = vmatprep.subr.mxu0 0.0
        %1799 = vmatpush2.msra.mxu0 0.0
        %1800 = vmatprep.subr.mxu0 0.0
        %1801 = vmatpush2.msra.mxu0 0.0
        %1802 = vmatprep.subr.mxu0 0.0
        %1803 = vmatpush2.msra.mxu0 0.0
        %1804 = vmatprep.subr.mxu0 0.0
        %1805 = vmatpush2.msra.mxu0 0.0
        %1806 = vmatprep.subr.mxu0 0.0
        %1807 = vmatpush2.msra.mxu0 0.0
        %1808 = vmatprep.subr.mxu0 0.0
        %1809 = vmatpush2.msra.mxu0 0.0
        %1810 = vmatprep.subr.mxu0 0.0
        %1811 = vmatpush2.msra.mxu0 0.0
        %1812 = vmatprep.subr.mxu0 0.0
        %1813 = vmatpush2.msra.mxu0 0.0
        %1814 = vmatprep.mubr.f32.mxu0 0.0
        %1815 = vmatmul.mubr.f32.gmra.mxu0 %v1748
        %v1816 = vpop.f32.mrf.mxu0
        %v1817 = vadd.f32 0.0, %v1816
        %v1818 = vpop.f32.mrf.mxu0
        %1819 = vdwg.mxu0
        %v1820 = vlaneseq
        %v1821 = vshrl.u32 %v1820, 7
        %v1822 = vsub.s32 0, %v1821
        %v1823 = vrot.slane %v1744, %v1822
        %v1824 = vsub.f32 %v1493, %v1823
        %v1825 = vsub.f32 %v1494, %v1823
        %v1826 = vlaneseq
        %v1827 = vshrl.u32 %v1826, 7
        %v1828 = vsub.s32 0, %v1827
        %v1829 = vrot.slane %v1817, %v1828
        %v1830 = vmul.f32 %v1824, %v1829
        %v1831 = vmul.f32 %v1825, %v1829
        %v1832 = vld [vmem:[%s7] sm:$0xff]
        %v1833 = vld [vmem:[%s7 + $0x8] sm:$0xff]
        %v1834 = vld [vmem:[%s7 + $0x10] sm:$0xff]
        %v1835 = vld [vmem:[%s7 + $0x18] sm:$0xff]
        %v1836 = vld [vmem:[%s7 + $0x20] sm:$0xff]
        %v1837 = vld [vmem:[%s7 + $0x28] sm:$0xff]
        %v1838 = vld [vmem:[%s7 + $0x30] sm:$0xff]
        %v1839 = vld [vmem:[%s7 + $0x38] sm:$0xff]
        %v1841 = vsel %vm338, %v334, 0
        %v1844 = vsel %vm338, %v335, 0
        %1846 = vmatprep.subr.mxu0 0.0
        %1847 = vmatpush1.msra.mxu0 0.0
        %1848 = vmatprep.subr.mxu0 0.0
        %1849 = vmatpush1.msra.mxu0 0.0
        %1850 = vmatprep.subr.mxu0 0.0
        %1851 = vmatpush1.msra.mxu0 0.0
        %1852 = vmatprep.subr.mxu0 0.0
        %1853 = vmatpush1.msra.mxu0 0.0
        %1854 = vmatprep.subr.mxu0 0.0
        %1855 = vmatpush1.msra.mxu0 0.0
        %1856 = vmatprep.subr.mxu0 0.0
        %1857 = vmatpush1.msra.mxu0 0.0
        %1858 = vmatprep.subr.mxu0 0.0
        %1859 = vmatpush1.msra.mxu0 0.0
        %1860 = vmatprep.subr.mxu0 0.0
        %1861 = vmatpush1.msra.mxu0 0.0
        %1862 = vmatprep.subr.mxu0 0.0
        %1863 = vmatpush1.msra.mxu0 %v1839
        %1864 = vmatprep.subr.mxu0 0.0
        %1865 = vmatpush1.msra.mxu0 %v1838
        %1866 = vmatprep.subr.mxu0 0.0
        %1867 = vmatpush1.msra.mxu0 %v1837
        %1868 = vmatprep.subr.mxu0 0.0
        %1869 = vmatpush1.msra.mxu0 %v1836
        %1870 = vmatprep.subr.mxu0 0.0
        %1871 = vmatpush1.msra.mxu0 %v1835
        %1872 = vmatprep.subr.mxu0 0.0
        %1873 = vmatpush1.msra.mxu0 %v1834
        %1874 = vmatprep.subr.mxu0 0.0
        %1875 = vmatpush1.msra.mxu0 %v1833
        %1876 = vmatprep.subr.mxu0 0.0
        %1877 = vmatpush1.msra.mxu0 %v1832
        %1878 = vmatprep.subr.mxu0 0.0
        %1879 = vmatpush2.msra.mxu0 0.0
        %1880 = vmatprep.subr.mxu0 0.0
        %1881 = vmatpush2.msra.mxu0 0.0
        %1882 = vmatprep.subr.mxu0 0.0
        %1883 = vmatpush2.msra.mxu0 0.0
        %1884 = vmatprep.subr.mxu0 0.0
        %1885 = vmatpush2.msra.mxu0 0.0
        %1886 = vmatprep.subr.mxu0 0.0
        %1887 = vmatpush2.msra.mxu0 0.0
        %1888 = vmatprep.subr.mxu0 0.0
        %1889 = vmatpush2.msra.mxu0 0.0
        %1890 = vmatprep.subr.mxu0 0.0
        %1891 = vmatpush2.msra.mxu0 0.0
        %1892 = vmatprep.subr.mxu0 0.0
        %1893 = vmatpush2.msra.mxu0 0.0
        %1894 = vmatprep.subr.mxu0 0.0
        %1895 = vmatpush2.msra.mxu0 0.0
        %1896 = vmatprep.subr.mxu0 0.0
        %1897 = vmatpush2.msra.mxu0 0.0
        %1898 = vmatprep.subr.mxu0 0.0
        %1899 = vmatpush2.msra.mxu0 0.0
        %1900 = vmatprep.subr.mxu0 0.0
        %1901 = vmatpush2.msra.mxu0 0.0
        %1902 = vmatprep.subr.mxu0 0.0
        %1903 = vmatpush2.msra.mxu0 0.0
        %1904 = vmatprep.subr.mxu0 0.0
        %1905 = vmatpush2.msra.mxu0 0.0
        %1906 = vmatprep.subr.mxu0 0.0
        %1907 = vmatpush2.msra.mxu0 0.0
        %1908 = vmatprep.subr.mxu0 0.0
        %1909 = vmatpush2.msra.mxu0 0.0
        %1910 = vmatprep.mubr.f32.mxu0 0.0
        %1911 = vmatmul.mubr.f32.gmra.mxu0 %v1841
        %v1912 = vpop.f32.mrf.mxu0
        %v1913 = vadd.f32 0.0, %v1912
        %v1914 = vpop.f32.mrf.mxu0
        %1915 = vmatprep.mubr.f32.mxu0 0.0
        %1916 = vmatmul.mubr.f32.gmra.mxu0 %v1844
        %v1917 = vpop.f32.mrf.mxu0
        %v1918 = vadd.f32 0.0, %v1917
        %v1919 = vpop.f32.mrf.mxu0
        %1920 = vdwg.mxu0
        %v1921 = vadd.f32 %v1913, %v1918
        %v1922 = vrot.slane %v1921, 4
        %v1923 = vadd.f32 %v1921, %v1922
        %v1924 = vrot.slane %v1923, 2
        %v1925 = vadd.f32 %v1923, %v1924
        %v1926 = vrot.slane %v1925, 1
        %v1927 = vadd.f32 %v1925, %v1926
        %v1928 = vmul.f32 %v1913, %v1913
        %v1929 = vmul.f32 %v1918, %v1918
        %v1930 = vadd.f32 %v1928, %v1929
        %v1931 = vrot.slane %v1930, 4
        %v1932 = vadd.f32 %v1930, %v1931
        %v1933 = vrot.slane %v1932, 2
        %v1934 = vadd.f32 %v1932, %v1933
        %v1935 = vrot.slane %v1934, 1
        %v1936 = vadd.f32 %v1934, %v1935
        %1937 = vmatprep.subr.mxu0 0.0
        %1938 = vmatpush1.msra.mxu0 %v1526
        %1939 = vmatprep.subr.mxu0 0.0
        %1940 = vmatpush1.msra.mxu0 %v1525
        %1941 = vmatprep.subr.mxu0 0.0
        %1942 = vmatpush1.msra.mxu0 %v1524
        %1943 = vmatprep.subr.mxu0 0.0
        %1944 = vmatpush1.msra.mxu0 %v1523
        %1945 = vmatprep.subr.mxu0 0.0
        %1946 = vmatpush1.msra.mxu0 %v1522
        %1947 = vmatprep.subr.mxu0 0.0
        %1948 = vmatpush1.msra.mxu0 %v1521
        %1949 = vmatprep.subr.mxu0 0.0
        %1950 = vmatpush1.msra.mxu0 %v1520
        %1951 = vmatprep.subr.mxu0 0.0
        %1952 = vmatpush1.msra.mxu0 %v1519
        %1953 = vmatprep.subr.mxu0 0.0
        %1954 = vmatpush1.msra.mxu0 %v1518
        %1955 = vmatprep.subr.mxu0 0.0
        %1956 = vmatpush1.msra.mxu0 %v1517
        %1957 = vmatprep.subr.mxu0 0.0
        %1958 = vmatpush1.msra.mxu0 %v1516
        %1959 = vmatprep.subr.mxu0 0.0
        %1960 = vmatpush1.msra.mxu0 %v1515
        %1961 = vmatprep.subr.mxu0 0.0
        %1962 = vmatpush1.msra.mxu0 %v1514
        %1963 = vmatprep.subr.mxu0 0.0
        %1964 = vmatpush1.msra.mxu0 %v1513
        %1965 = vmatprep.subr.mxu0 0.0
        %1966 = vmatpush1.msra.mxu0 %v1512
        %1967 = vmatprep.subr.mxu0 0.0
        %1968 = vmatpush1.msra.mxu0 %v1511
        %1969 = vmatprep.subr.mxu0 0.0
        %1970 = vmatpush2.msra.mxu0 0.0
        %1971 = vmatprep.subr.mxu0 0.0
        %1972 = vmatpush2.msra.mxu0 0.0
        %1973 = vmatprep.subr.mxu0 0.0
        %1974 = vmatpush2.msra.mxu0 0.0
        %1975 = vmatprep.subr.mxu0 0.0
        %1976 = vmatpush2.msra.mxu0 0.0
        %1977 = vmatprep.subr.mxu0 0.0
        %1978 = vmatpush2.msra.mxu0 0.0
        %1979 = vmatprep.subr.mxu0 0.0
        %1980 = vmatpush2.msra.mxu0 0.0
        %1981 = vmatprep.subr.mxu0 0.0
        %1982 = vmatpush2.msra.mxu0 0.0
        %1983 = vmatprep.subr.mxu0 0.0
        %1984 = vmatpush2.msra.mxu0 0.0
        %1985 = vmatprep.subr.mxu0 0.0
        %1986 = vmatpush2.msra.mxu0 0.0
        %1987 = vmatprep.subr.mxu0 0.0
        %1988 = vmatpush2.msra.mxu0 0.0
        %1989 = vmatprep.subr.mxu0 0.0
        %1990 = vmatpush2.msra.mxu0 0.0
        %1991 = vmatprep.subr.mxu0 0.0
        %1992 = vmatpush2.msra.mxu0 0.0
        %1993 = vmatprep.subr.mxu0 0.0
        %1994 = vmatpush2.msra.mxu0 0.0
        %1995 = vmatprep.subr.mxu0 0.0
        %1996 = vmatpush2.msra.mxu0 0.0
        %1997 = vmatprep.subr.mxu0 0.0
        %1998 = vmatpush2.msra.mxu0 0.0
        %1999 = vmatprep.subr.mxu0 0.0
        %2000 = vmatpush2.msra.mxu0 0.0
        %2001 = vmatprep.mubr.f32.mxu0 0.0
        %2002 = vmatmul.mubr.f32.gmra.mxu0 %v1927
        %v2003 = vpop.f32.mrf.mxu0
        %v2004 = vadd.f32 0.0, %v2003
        %v2005 = vpop.f32.mrf.mxu0
        %2006 = vdwg.mxu0
        %2007 = vmatprep.subr.mxu0 0.0
        %2008 = vmatpush1.msra.mxu0 %v1526
        %2009 = vmatprep.subr.mxu0 0.0
        %2010 = vmatpush1.msra.mxu0 %v1525
        %2011 = vmatprep.subr.mxu0 0.0
        %2012 = vmatpush1.msra.mxu0 %v1524
        %2013 = vmatprep.subr.mxu0 0.0
        %2014 = vmatpush1.msra.mxu0 %v1523
        %2015 = vmatprep.subr.mxu0 0.0
        %2016 = vmatpush1.msra.mxu0 %v1522
        %2017 = vmatprep.subr.mxu0 0.0
        %2018 = vmatpush1.msra.mxu0 %v1521
        %2019 = vmatprep.subr.mxu0 0.0
        %2020 = vmatpush1.msra.mxu0 %v1520
        %2021 = vmatprep.subr.mxu0 0.0
        %2022 = vmatpush1.msra.mxu0 %v1519
        %2023 = vmatprep.subr.mxu0 0.0
        %2024 = vmatpush1.msra.mxu0 %v1518
        %2025 = vmatprep.subr.mxu0 0.0
        %2026 = vmatpush1.msra.mxu0 %v1517
        %2027 = vmatprep.subr.mxu0 0.0
        %2028 = vmatpush1.msra.mxu0 %v1516
        %2029 = vmatprep.subr.mxu0 0.0
        %2030 = vmatpush1.msra.mxu0 %v1515
        %2031 = vmatprep.subr.mxu0 0.0
        %2032 = vmatpush1.msra.mxu0 %v1514
        %2033 = vmatprep.subr.mxu0 0.0
        %2034 = vmatpush1.msra.mxu0 %v1513
        %2035 = vmatprep.subr.mxu0 0.0
        %2036 = vmatpush1.msra.mxu0 %v1512
        %2037 = vmatprep.subr.mxu0 0.0
        %2038 = vmatpush1.msra.mxu0 %v1511
        %2039 = vmatprep.subr.mxu0 0.0
        %2040 = vmatpush2.msra.mxu0 0.0
        %2041 = vmatprep.subr.mxu0 0.0
        %2042 = vmatpush2.msra.mxu0 0.0
        %2043 = vmatprep.subr.mxu0 0.0
        %2044 = vmatpush2.msra.mxu0 0.0
        %2045 = vmatprep.subr.mxu0 0.0
        %2046 = vmatpush2.msra.mxu0 0.0
        %2047 = vmatprep.subr.mxu0 0.0
        %2048 = vmatpush2.msra.mxu0 0.0
        %2049 = vmatprep.subr.mxu0 0.0
        %2050 = vmatpush2.msra.mxu0 0.0
        %2051 = vmatprep.subr.mxu0 0.0
        %2052 = vmatpush2.msra.mxu0 0.0
        %2053 = vmatprep.subr.mxu0 0.0
        %2054 = vmatpush2.msra.mxu0 0.0
        %2055 = vmatprep.subr.mxu0 0.0
        %2056 = vmatpush2.msra.mxu0 0.0
        %2057 = vmatprep.subr.mxu0 0.0
        %2058 = vmatpush2.msra.mxu0 0.0
        %2059 = vmatprep.subr.mxu0 0.0
        %2060 = vmatpush2.msra.mxu0 0.0
        %2061 = vmatprep.subr.mxu0 0.0
        %2062 = vmatpush2.msra.mxu0 0.0
        %2063 = vmatprep.subr.mxu0 0.0
        %2064 = vmatpush2.msra.mxu0 0.0
        %2065 = vmatprep.subr.mxu0 0.0
        %2066 = vmatpush2.msra.mxu0 0.0
        %2067 = vmatprep.subr.mxu0 0.0
        %2068 = vmatpush2.msra.mxu0 0.0
        %2069 = vmatprep.subr.mxu0 0.0
        %2070 = vmatpush2.msra.mxu0 0.0
        %2071 = vmatprep.mubr.f32.mxu0 0.0
        %2072 = vmatmul.mubr.f32.gmra.mxu0 %v1936
        %v2073 = vpop.f32.mrf.mxu0
        %v2074 = vadd.f32 0.0, %v2073
        %v2075 = vpop.f32.mrf.mxu0
        %2076 = vdwg.mxu0
        %v2077 = vmul.f32 %v2004, 0.00390625
        %v2078 = vmul.f32 %v2074, 0.00390625
        %v2079 = vmul.f32 %v2077, %v2077
        %v2080 = vsub.f32 %v2078, %v2079
        %v2081 = vadd.f32 %v2080, 1e-05
        %v2082 = vrsqrt.pop %v2081
        %v2084 = vsel %vm889, %v2077, 0
        %2086 = vmatprep.subr.mxu0 0.0
        %2087 = vmatpush1.msra.mxu0 0.0
        %2088 = vmatprep.subr.mxu0 0.0
        %2089 = vmatpush1.msra.mxu0 0.0
        %2090 = vmatprep.subr.mxu0 0.0
        %2091 = vmatpush1.msra.mxu0 0.0
        %2092 = vmatprep.subr.mxu0 0.0
        %2093 = vmatpush1.msra.mxu0 0.0
        %2094 = vmatprep.subr.mxu0 0.0
        %2095 = vmatpush1.msra.mxu0 0.0
        %2096 = vmatprep.subr.mxu0 0.0
        %2097 = vmatpush1.msra.mxu0 0.0
        %2098 = vmatprep.subr.mxu0 0.0
        %2099 = vmatpush1.msra.mxu0 0.0
        %2100 = vmatprep.subr.mxu0 0.0
        %2101 = vmatpush1.msra.mxu0 0.0
        %2102 = vmatprep.subr.mxu0 0.0
        %2103 = vmatpush1.msra.mxu0 0.0
        %2104 = vmatprep.subr.mxu0 0.0
        %2105 = vmatpush1.msra.mxu0 0.0
        %2106 = vmatprep.subr.mxu0 0.0
        %2107 = vmatpush1.msra.mxu0 0.0
        %2108 = vmatprep.subr.mxu0 0.0
        %2109 = vmatpush1.msra.mxu0 0.0
        %2110 = vmatprep.subr.mxu0 0.0
        %2111 = vmatpush1.msra.mxu0 0.0
        %2112 = vmatprep.subr.mxu0 0.0
        %2113 = vmatpush1.msra.mxu0 0.0
        %2114 = vmatprep.subr.mxu0 0.0
        %2115 = vmatpush1.msra.mxu0 0.0
        %2116 = vmatprep.subr.mxu0 0.0
        %2117 = vmatpush1.msra.mxu0 %v1673
        %2118 = vmatprep.subr.mxu0 0.0
        %2119 = vmatpush2.msra.mxu0 0.0
        %2120 = vmatprep.subr.mxu0 0.0
        %2121 = vmatpush2.msra.mxu0 0.0
        %2122 = vmatprep.subr.mxu0 0.0
        %2123 = vmatpush2.msra.mxu0 0.0
        %2124 = vmatprep.subr.mxu0 0.0
        %2125 = vmatpush2.msra.mxu0 0.0
        %2126 = vmatprep.subr.mxu0 0.0
        %2127 = vmatpush2.msra.mxu0 0.0
        %2128 = vmatprep.subr.mxu0 0.0
        %2129 = vmatpush2.msra.mxu0 0.0
        %2130 = vmatprep.subr.mxu0 0.0
        %2131 = vmatpush2.msra.mxu0 0.0
        %2132 = vmatprep.subr.mxu0 0.0
        %2133 = vmatpush2.msra.mxu0 0.0
        %2134 = vmatprep.subr.mxu0 0.0
        %2135 = vmatpush2.msra.mxu0 0.0
        %2136 = vmatprep.subr.mxu0 0.0
        %2137 = vmatpush2.msra.mxu0 0.0
        %2138 = vmatprep.subr.mxu0 0.0
        %2139 = vmatpush2.msra.mxu0 0.0
        %2140 = vmatprep.subr.mxu0 0.0
        %2141 = vmatpush2.msra.mxu0 0.0
        %2142 = vmatprep.subr.mxu0 0.0
        %2143 = vmatpush2.msra.mxu0 0.0
        %2144 = vmatprep.subr.mxu0 0.0
        %2145 = vmatpush2.msra.mxu0 0.0
        %2146 = vmatprep.subr.mxu0 0.0
        %2147 = vmatpush2.msra.mxu0 0.0
        %2148 = vmatprep.subr.mxu0 0.0
        %2149 = vmatpush2.msra.mxu0 0.0
        %2150 = vmatprep.mubr.f32.mxu0 0.0
        %2151 = vmatmul.mubr.f32.gmra.mxu0 %v2084
        %v2152 = vpop.f32.mrf.mxu0
        %v2153 = vadd.f32 0.0, %v2152
        %v2154 = vpop.f32.mrf.mxu0
        %2155 = vdwg.mxu0
        %v2157 = vsel %vm889, %v2082, 0
        %2159 = vmatprep.subr.mxu0 0.0
        %2160 = vmatpush1.msra.mxu0 0.0
        %2161 = vmatprep.subr.mxu0 0.0
        %2162 = vmatpush1.msra.mxu0 0.0
        %2163 = vmatprep.subr.mxu0 0.0
        %2164 = vmatpush1.msra.mxu0 0.0
        %2165 = vmatprep.subr.mxu0 0.0
        %2166 = vmatpush1.msra.mxu0 0.0
        %2167 = vmatprep.subr.mxu0 0.0
        %2168 = vmatpush1.msra.mxu0 0.0
        %2169 = vmatprep.subr.mxu0 0.0
        %2170 = vmatpush1.msra.mxu0 0.0
        %2171 = vmatprep.subr.mxu0 0.0
        %2172 = vmatpush1.msra.mxu0 0.0
        %2173 = vmatprep.subr.mxu0 0.0
        %2174 = vmatpush1.msra.mxu0 0.0
        %2175 = vmatprep.subr.mxu0 0.0
        %2176 = vmatpush1.msra.mxu0 0.0
        %2177 = vmatprep.subr.mxu0 0.0
        %2178 = vmatpush1.msra.mxu0 0.0
        %2179 = vmatprep.subr.mxu0 0.0
        %2180 = vmatpush1.msra.mxu0 0.0
        %2181 = vmatprep.subr.mxu0 0.0
        %2182 = vmatpush1.msra.mxu0 0.0
        %2183 = vmatprep.subr.mxu0 0.0
        %2184 = vmatpush1.msra.mxu0 0.0
        %2185 = vmatprep.subr.mxu0 0.0
        %2186 = vmatpush1.msra.mxu0 0.0
        %2187 = vmatprep.subr.mxu0 0.0
        %2188 = vmatpush1.msra.mxu0 0.0
        %2189 = vmatprep.subr.mxu0 0.0
        %2190 = vmatpush1.msra.mxu0 %v1673
        %2191 = vmatprep.subr.mxu0 0.0
        %2192 = vmatpush2.msra.mxu0 0.0
        %2193 = vmatprep.subr.mxu0 0.0
        %2194 = vmatpush2.msra.mxu0 0.0
        %2195 = vmatprep.subr.mxu0 0.0
        %2196 = vmatpush2.msra.mxu0 0.0
        %2197 = vmatprep.subr.mxu0 0.0
        %2198 = vmatpush2.msra.mxu0 0.0
        %2199 = vmatprep.subr.mxu0 0.0
        %2200 = vmatpush2.msra.mxu0 0.0
        %2201 = vmatprep.subr.mxu0 0.0
        %2202 = vmatpush2.msra.mxu0 0.0
        %2203 = vmatprep.subr.mxu0 0.0
        %2204 = vmatpush2.msra.mxu0 0.0
        %2205 = vmatprep.subr.mxu0 0.0
        %2206 = vmatpush2.msra.mxu0 0.0
        %2207 = vmatprep.subr.mxu0 0.0
        %2208 = vmatpush2.msra.mxu0 0.0
        %2209 = vmatprep.subr.mxu0 0.0
        %2210 = vmatpush2.msra.mxu0 0.0
        %2211 = vmatprep.subr.mxu0 0.0
        %2212 = vmatpush2.msra.mxu0 0.0
        %2213 = vmatprep.subr.mxu0 0.0
        %2214 = vmatpush2.msra.mxu0 0.0
        %2215 = vmatprep.subr.mxu0 0.0
        %2216 = vmatpush2.msra.mxu0 0.0
        %2217 = vmatprep.subr.mxu0 0.0
        %2218 = vmatpush2.msra.mxu0 0.0
        %2219 = vmatprep.subr.mxu0 0.0
        %2220 = vmatpush2.msra.mxu0 0.0
        %2221 = vmatprep.subr.mxu0 0.0
        %2222 = vmatpush2.msra.mxu0 0.0
        %2223 = vmatprep.mubr.f32.mxu0 0.0
        %2224 = vmatmul.mubr.f32.gmra.mxu0 %v2157
        %v2225 = vpop.f32.mrf.mxu0
        %v2226 = vadd.f32 0.0, %v2225
        %v2227 = vpop.f32.mrf.mxu0
        %2228 = vdwg.mxu0
        %v2229 = vlaneseq
        %v2230 = vshrl.u32 %v2229, 7
        %v2231 = vsub.s32 0, %v2230
        %v2232 = vrot.slane %v2153, %v2231
        %v2233 = vsub.f32 %v1913, %v2232
        %v2234 = vsub.f32 %v1918, %v2232
        %v2235 = vlaneseq
        %v2236 = vshrl.u32 %v2235, 7
        %v2237 = vsub.s32 0, %v2236
        %v2238 = vrot.slane %v2226, %v2237
        %v2239 = vmul.f32 %v2233, %v2238
        %v2240 = vmul.f32 %v2234, %v2238
        %v2241 = vadd.f32 %v1830, %v2239
        %v2242 = vadd.f32 %v1831, %v2240
        %v2243 = vmax.f32 %v2241, 0.0
        %v2244 = vmax.f32 %v2242, 0.0
        %2245 = vst [vmem:[%s328] sm:$0xff] %v2243
        %2246 = vst [vmem:[%s328 + $0x8] sm:$0xff] %v2244
        %s2247 = sand.u32 %s205, 1
        %s2248 = scalar_lea.sflag [#allocation6], %s2247
        %s2249 = sand.u32 %s205, 1
        %s2250 = smul.addr %s2249, 16
        %s2251 = scalar_lea.vmem [#allocation9], %s2250
        // Predicated region
        $region61: #{tpu_custom_call.1} parent=51 // pred_check
          %p2252 = pneg %p215
        $region62: #{tpu_custom_call.1} parent=51 // pred_check_branch
          %2254 = sbr.rel (%p2252) target = $region64
        $region63: #{tpu_custom_call.1} parent=51 // pred_region
          %s2256 = ssub.s32 256, 256
          %2257 = vsyncadd %s2248, %s2256
          %s2258 = smul.addr %s24, 2
          %s2259 = smul.addr %s2258, 128
          %s2260 = scalar_lea.hbm %s8, %s2259
          %s2261 = sshll.u32 %s2251, 4
          %s2262 = int_to_ptr.vmem [resolvable:$true] %s2261
          %2267 = dma.vmem_to_hbm [thread:$0]  %s2262, 256, %s2260, %s2248, 128, 128, 8
        $region64: #{tpu_custom_call.1} parent=51 // pred_fallthru
          _
      $region52: #{tpu_custom_call.1} parent=5 // pred_fallthru
        _
      %p2268 = scmp.le.s32.totalorder 2, %s19
      // Predicated region
      $region65: #{tpu_custom_call.1} parent=5 // pred_check
        %p2269 = pneg %p2268
      $region66: #{tpu_custom_call.1} parent=5 // pred_check_branch
        %2271 = sbr.rel (%p2269) target = $region68
      $region67: #{tpu_custom_call.1} parent=5 // pred_region
        %s2272 = ssub.s32 %s19, 2
        // Predicated region
        $region69: #{tpu_custom_call.1} parent=67 // pred_check
          %p2273 = pneg %p221
        $region70: #{tpu_custom_call.1} parent=67 // pred_check_branch
          %2275 = sbr.rel (%p2273) target = $region72
        $region71: #{tpu_custom_call.1} parent=67 // pred_region
          %s2276 = sand.u32 %s206, 1
          %s2277 = scalar_lea.sflag [#allocation6], %s2276
          %s2278 = sand.u32 %s206, 1
          %s2279 = smul.addr %s2278, 16
          %s2280 = scalar_lea.vmem [#allocation9], %s2279
          %2281 = dma.done %s2277, 256
        $region72: #{tpu_custom_call.1} parent=67 // pred_fallthru
          _
      $region68: #{tpu_custom_call.1} parent=5 // pred_fallthru
        _
    $region6: #{tpu_custom_call.1} parent=1 // loop_footer
      %s23 = sadd.s32 1, %s19
    $region7: #{tpu_custom_call.1} parent=1 // loop_footer_branch
      %18 = sbr.rel target = $region3
    $region8: #{tpu_custom_call.1} parent=1 // loop_exit
      _
    %2282 = vsyncpa [#allocation5], 1
    %s2283 = scalar_lea.sflag [#allocation5], 1
    %2284 = vsyncpa %s2283, 1
    %2285 = vsyncpa [#allocation8], 1
    %2286 = vsyncpa [#allocation6], 1
    %s2287 = scalar_lea.sflag [#allocation6], 1
    %2288 = vsyncpa %s2287, 1

</llo_original>
